<compile_context>
chip_gen: v7x
topology: tpu7x:2x2x1
jax: 0.10.0
libtpu: 0.0.40
codegen_flags: <defaults>
</compile_context>

<pallas_src>
import jax
import jax.numpy as jnp
from jax.experimental import pallas as pl
from jax.experimental.pallas import tpu as pltpu


def _round_up(x, m):
    return ((x + m - 1) // m) * m


def _vmem_cap_bytes():
    try:
        return int(pltpu.get_tpu_info().vmem_capacity_bytes)
    except Exception:
        return 64 * 1024 * 1024  # conservative default (v7x per-core VMEM)


# ----------------------------- kernels --------------------------------------


def _make_fused_kernel(num_weights):
    """Whole MLP per batch tile; all (padded) weights VMEM-resident."""

    def kernel(*refs):
        x_ref = refs[0]
        w_refs = refs[1:1 + num_weights]
        o_ref = refs[1 + num_weights]
        # Cast the streamed f32 x tile to bf16 on the VPU (free under MXU work).
        h = x_ref[...].astype(jnp.bfloat16)
        acc = None
        for idx, w_ref in enumerate(w_refs):
            acc = jnp.dot(h, w_ref[...], preferred_element_type=jnp.float32)
            if idx < num_weights - 1:
                h = jnp.maximum(acc, 0.0).astype(jnp.bfloat16)
        o_ref[...] = acc.astype(o_ref.dtype)

    return kernel


def _ktiled_kernel(x_ref, w1_ref, w2_ref, w3_ref, o_ref, acc_ref):
    """depth==3 path: hidden width tiled along a trailing 'arbitrary' K axis."""
    k = pl.program_id(1)

    @pl.when(k == 0)
    def _init():
        acc_ref[...] = jnp.zeros_like(acc_ref)

    x = x_ref[...].astype(jnp.bfloat16)
    # Column-slice of layer-1 output for this K chunk (full reduction over input_dim).
    h1 = jnp.dot(x, w1_ref[...], preferred_element_type=jnp.float32)
    h1 = jnp.maximum(h1, 0.0).astype(jnp.bfloat16)
    # Accumulate this chunk's contribution to layer-2 output.
    acc_ref[...] += jnp.dot(h1, w2_ref[...], preferred_element_type=jnp.float32)

    @pl.when(k == pl.num_programs(1) - 1)
    def _finalize():
        h2 = jnp.maximum(acc_ref[...], 0.0).astype(jnp.bfloat16)
        o_ref[...] = jnp.dot(
            h2, w3_ref[...], preferred_element_type=jnp.float32
        ).astype(o_ref.dtype)


# ----------------------------- pallas_call builders --------------------------


def _call_fused(x2d, wps, b_pad, tile_b, grid_b, input_dim, width_p, nc_p,
                flops, vmem_limit):
    n_w = len(wps)
    kernel = _make_fused_kernel(n_w)
    w_bytes = sum(int(w.size) * 2 for w in wps)
    bytes_accessed = b_pad * input_dim * 4 + w_bytes + b_pad * nc_p * 4

    def build(use_pipeline_modes):
        def pm(nbuf):
            return ({"pipeline_mode": pl.Buffered(nbuf)}
                    if use_pipeline_modes else {})

        # x stream: triple-buffer only when the grid is long enough to use it.
        x_kwargs = pm(3) if grid_b > 2 else {}
        in_specs = [pl.BlockSpec((tile_b, input_dim), lambda i: (i, 0), **x_kwargs)]
        # Weights: constant index_map => DMA'd once, stay VMEM-resident; one buffer.
        for w in wps:
            in_specs.append(pl.BlockSpec(w.shape, lambda i: (0, 0), **pm(1)))

        return pl.pallas_call(
            kernel,
            out_shape=jax.ShapeDtypeStruct((b_pad, nc_p), jnp.float32),
            grid=(grid_b,),
            in_specs=in_specs,
            out_specs=pl.BlockSpec((tile_b, nc_p), lambda i: (i, 0)),
            compiler_params=pltpu.CompilerParams(
                dimension_semantics=("parallel",),
                vmem_limit_bytes=vmem_limit,
            ),
            cost_estimate=pl.CostEstimate(
                flops=flops, transcendentals=0, bytes_accessed=bytes_accessed),
        )

    try:
        return build(True)(x2d, *wps)
    except Exception:
        # pipeline_mode / Buffered not supported on this jax build: plain specs.
        return build(False)(x2d, *wps)


def _call_ktiled(x2d, wps, b_pad, tile_b, grid_b, k_tile, input_dim, width_p,
                 nc_p, flops, vmem_limit):
    w1, w2, w3 = wps
    grid_k = width_p // k_tile

    # w1/w2 re-streamed once per batch tile; x/out streamed once; w3 resident.
    bytes_accessed = (b_pad * input_dim * 4
                      + grid_b * (int(w1.size) + int(w2.size)) * 2
                      + int(w3.size) * 2
                      + b_pad * nc_p * 4)

    return pl.pallas_call(
        _ktiled_kernel,
        out_shape=jax.ShapeDtypeStruct((b_pad, nc_p), jnp.float32),
        grid=(grid_b, grid_k),
        in_specs=[
            pl.BlockSpec((tile_b, input_dim), lambda i, k: (i, 0)),
            pl.BlockSpec((input_dim, k_tile), lambda i, k: (0, k)),
            pl.BlockSpec((k_tile, width_p), lambda i, k: (k, 0)),
            pl.BlockSpec((width_p, nc_p), lambda i, k: (0, 0)),
        ],
        out_specs=pl.BlockSpec((tile_b, nc_p), lambda i, k: (i, 0)),
        scratch_shapes=[pltpu.VMEM((tile_b, width_p), jnp.float32)],
        compiler_params=pltpu.CompilerParams(
            dimension_semantics=("parallel", "arbitrary"),
            vmem_limit_bytes=vmem_limit,
        ),
        cost_estimate=pl.CostEstimate(
            flops=flops, transcendentals=0, bytes_accessed=bytes_accessed),
    )(x2d, w1, w2, w3)


# ----------------------------- params & wrapper -------------------------------


def init_params(key, input_dim=28 * 28, width=50, depth=3, num_classes=10):
    """(in, out)-layout, bias-free weights matching torch's FullyConnected."""
    dims = [input_dim] + [width] * (depth - 1) + [num_classes]
    keys = jax.random.split(key, depth)
    ws = []
    for i in range(depth):
        ws.append(jax.random.normal(keys[i], (dims[i], dims[i + 1]), jnp.float32)
                  / jnp.sqrt(dims[i]))
    return ws


def prepare_params(weights):
    """Zero-pad every feature dim except the first (input_dim) to a multiple of
    128 and cast to bf16 (done once). Zero padding is a no-op through ReLU."""
    padded = []
    for idx, w in enumerate(weights):
        d_in, d_out = w.shape
        p_in = d_in if idx == 0 else _round_up(d_in, 128)
        p_out = _round_up(d_out, 128)
        wp = jnp.zeros((p_in, p_out), jnp.bfloat16).at[:d_in, :d_out].set(
            w.astype(jnp.bfloat16))
        padded.append(wp)
    return padded, weights[-1].shape[1]


def fully_connected_forward(x, wps, num_classes, *, tile_b=512, k_tile=512,
                            force_k_tiling=False):
    """x: (B, ...) flattened to (B, input_dim); returns (B, num_classes) f32."""
    B = x.shape[0]
    input_dim = wps[0].shape[0]
    width_p = wps[0].shape[1]
    nc_p = wps[-1].shape[1]
    n_w = len(wps)

    # x stays f32 in HBM; the kernel casts each streamed tile to bf16, so there is
    # no wrapper-side convert/pad pass (no extra HBM round trip).
    x2d = x.reshape(B, input_dim)

    vmem_cap = _vmem_cap_bytes()
    w_bytes = sum(int(w.size) * 2 for w in wps)

    # ---- batch tiling --------------------------------------------------------
    tile_b = max(16, _round_up(tile_b, 16))
    b_ceil = _round_up(max(B, 16), 16)
    if b_ceil <= tile_b:
        tile_b = b_ceil                      # one tile covers the whole batch
    else:
        # Guarantee >= 2 grid steps so v7x's two TensorCores both get work.
        tile_b = min(tile_b, _round_up(pl.cdiv(b_ceil, 2), 16))

    use_k_tiling = (n_w == 3) and (force_k_tiling or width_p >= 2048)
    # TODO(synk): the K-tiled path only covers depth==3; deeper nets with very
    # large hidden width still go through the fused path (single (width, width)
    # weight blocks), which may exceed v7x's 64 MiB VMEM.

    if use_k_tiling:
        kt = min(max(128, _round_up(k_tile, 128)), width_p)
        if width_p % kt != 0:
            kt = max(d for d in range(128, kt + 1, 128) if width_p % d == 0)

        def vmem_need(tb):
            return (2 * tb * input_dim * 4        # x (f32, double-buffered)
                    + 2 * input_dim * kt * 2      # w1 K-slab
                    + 2 * kt * width_p * 2        # w2 K-slab
                    + 2 * width_p * nc_p * 2      # w3
                    + 2 * tb * nc_p * 4           # out
                    + tb * width_p * 4            # f32 accumulator scratch
                    + 3 * tb * kt * 4)            # activation temporaries
    else:
        kt = None

        def vmem_need(tb):
            return (3 * tb * input_dim * 4        # x (f32, up to 3 buffers)
                    + 2 * tb * nc_p * 4           # out (f32, double-buffered)
                    + 2 * w_bytes                 # weights (worst case 2 buffers)
                    + 4 * tb * width_p * 4)       # activation temporaries

    # Shrink the batch tile if the working set would not fit on-chip.
    while tile_b > 64 and vmem_need(tile_b) > int(0.7 * vmem_cap):
        tile_b = max(64, _round_up(tile_b // 2, 16))

    b_pad = _round_up(b_ceil, tile_b)
    if b_pad != B:
        x2d = jnp.pad(x2d, ((0, b_pad - B), (0, 0)))
    grid_b = b_pad // tile_b

    # Generation-aware scoped-VMEM bound (~75% of physical capacity).
    vmem_limit = int(min(max(int(1.5 * vmem_need(tile_b)), 8 * 1024 * 1024),
                         int(0.75 * vmem_cap)))
    flops = 2 * b_pad * sum(int(w.shape[0]) * int(w.shape[1]) for w in wps)

    if use_k_tiling:
        out_padded = _call_ktiled(x2d, wps, b_pad, tile_b, grid_b, kt,
                                  input_dim, width_p, nc_p, flops, vmem_limit)
    else:
        out_padded = _call_fused(x2d, wps, b_pad, tile_b, grid_b,
                                 input_dim, width_p, nc_p, flops, vmem_limit)

    return out_padded[:B, :num_classes]


# ----------------------------- reference & demo -------------------------------


def _reference_bf16(x2d, weights):
    """Kernel-precision reference: bf16 operands, f32 accumulation."""
    def bf(a):
        return a.astype(jnp.bfloat16).astype(jnp.float32)

    h = bf(x2d)
    for idx, w in enumerate(weights):
        h = h @ bf(w)
        if idx < len(weights) - 1:
            h = bf(jnp.maximum(h, 0.0))
    return h


if __name__ == "__main__":
    key = jax.random.PRNGKey(0)
    kx, kp, kx2, kp2 = jax.random.split(key, 4)

    # --- module defaults: input_dim=28*28, width=50, depth=3, num_classes=10 ---
    B = 2
    input_dim, width, depth, num_classes = 28 * 28, 50, 3, 10
    x = jax.random.normal(kx, (B, 1, 28, 28), jnp.float32)
    weights = init_params(kp, input_dim, width, depth, num_classes)
    wps, nc = prepare_params(weights)

    out = fully_connected_forward(x, wps, nc)
    out = jax.block_until_ready(out)
    assert out.shape == (B, num_classes)

    x2d = x.reshape(B, input_dim)
    ref_bf16 = _reference_bf16(x2d, weights)
    assert jnp.allclose(out, ref_bf16, atol=1e-3, rtol=1e-3)

    ref_f32 = x2d
    for idx, w in enumerate(weights):
        ref_f32 = ref_f32 @ w
        if idx < len(weights) - 1:
            ref_f32 = jnp.maximum(ref_f32, 0.0)
    assert jnp.allclose(out, ref_f32, atol=5e-2, rtol=5e-2)

    # --- exercise the large-width (K-tiled / v7x) path at a small shape ---------
    B2, in2, width2, nc2 = 4, 128, 256, 10
    x_k = jax.random.normal(kx2, (B2, in2), jnp.float32)
    weights_k = init_params(kp2, in2, width2, 3, nc2)
    wps_k, nck = prepare_params(weights_k)
    out_k = fully_connected_forward(x_k, wps_k, nck,
                                    force_k_tiling=True, k_tile=128)
    out_k = jax.block_until_ready(out_k)
    assert out_k.shape == (B2, nc2)
    ref_k = _reference_bf16(x_k, weights_k)
    assert jnp.allclose(out_k, ref_k, atol=1e-3, rtol=1e-3)

    print("KERNEL_OK")
</pallas_src>

<mosaic_0001>
module attributes {stable_mosaic.version = 11 : i64} {
  func.func @kernel(%arg0: i32, %arg1: memref<16x784xf32, #tpu.memory_space<vmem>>, %arg2: memref<784x128xbf16, #tpu.memory_space<vmem>>, %arg3: memref<128x128xbf16, #tpu.memory_space<vmem>>, %arg4: memref<128x128xbf16, #tpu.memory_space<vmem>>, %arg5: memref<16x128xf32, #tpu.memory_space<vmem>>) attributes {dimension_semantics = [#tpu.dimension_semantics<parallel>], iteration_bounds = array<i64: 1>, scalar_prefetch = 0 : i64, scratch_operands = 0 : i64, tpu.core_type = #tpu.core_type<tc>, window_params = [{transform_indices = @transform_0, window_bounds = array<i64: 16, 784>}, {pipeline_mode = #tpu.pipeline_mode<synchronous>, transform_indices = @transform_1, window_bounds = array<i64: 784, 128>}, {pipeline_mode = #tpu.pipeline_mode<synchronous>, transform_indices = @transform_2, window_bounds = array<i64: 128, 128>}, {pipeline_mode = #tpu.pipeline_mode<synchronous>, transform_indices = @transform_3, window_bounds = array<i64: 128, 128>}, {transform_indices = @transform_4, window_bounds = array<i64: 16, 128>}]} {
    %c0 = arith.constant 0 : index
    %c0_0 = arith.constant 0 : index
    %0 = vector.load %arg1[%c0, %c0_0] : memref<16x784xf32, #tpu.memory_space<vmem>>, vector<16x784xf32>
    %1 = arith.truncf %0 : vector<16x784xf32> to vector<16x784xbf16>
    %c0_1 = arith.constant 0 : index
    %c0_2 = arith.constant 0 : index
    %2 = vector.load %arg2[%c0_1, %c0_2] : memref<784x128xbf16, #tpu.memory_space<vmem>>, vector<784x128xbf16>
    %cst = arith.constant dense<0.000000e+00> : vector<16x128xf32>
    %3 = tpu.matmul %1, %2, %cst {dimension_numbers = #tpu.dot_dimension_numbers<[1], [0], [0], [1], [0, 0, 1, 1], [], []>} : vector<16x784xbf16>, vector<784x128xbf16>, vector<16x128xf32> -> vector<16x128xf32>
    %cst_3 = arith.constant 0.000000e+00 : f32
    %4 = vector.broadcast %cst_3 : f32 to vector<16x128xf32>
    %5 = arith.maximumf %3, %4 : vector<16x128xf32>
    %6 = arith.truncf %5 : vector<16x128xf32> to vector<16x128xbf16>
    %c0_4 = arith.constant 0 : index
    %c0_5 = arith.constant 0 : index
    %7 = vector.load %arg3[%c0_4, %c0_5] : memref<128x128xbf16, #tpu.memory_space<vmem>>, vector<128x128xbf16>
    %cst_6 = arith.constant dense<0.000000e+00> : vector<16x128xf32>
    %8 = tpu.matmul %6, %7, %cst_6 {dimension_numbers = #tpu.dot_dimension_numbers<[1], [0], [0], [1], [0, 0, 1, 1], [], []>} : vector<16x128xbf16>, vector<128x128xbf16>, vector<16x128xf32> -> vector<16x128xf32>
    %cst_7 = arith.constant 0.000000e+00 : f32
    %9 = vector.broadcast %cst_7 : f32 to vector<16x128xf32>
    %10 = arith.maximumf %8, %9 : vector<16x128xf32>
    %11 = arith.truncf %10 : vector<16x128xf32> to vector<16x128xbf16>
    %c0_8 = arith.constant 0 : index
    %c0_9 = arith.constant 0 : index
    %12 = vector.load %arg4[%c0_8, %c0_9] : memref<128x128xbf16, #tpu.memory_space<vmem>>, vector<128x128xbf16>
    %cst_10 = arith.constant dense<0.000000e+00> : vector<16x128xf32>
    %13 = tpu.matmul %11, %12, %cst_10 {dimension_numbers = #tpu.dot_dimension_numbers<[1], [0], [0], [1], [0, 0, 1, 1], [], []>} : vector<16x128xbf16>, vector<128x128xbf16>, vector<16x128xf32> -> vector<16x128xf32>
    %c0_11 = arith.constant 0 : index
    %c0_12 = arith.constant 0 : index
    %14 = vector.load %arg5[%c0_11, %c0_12] : memref<16x128xf32, #tpu.memory_space<vmem>>, vector<16x128xf32>
    tpu.vector_store %arg5[%c0_11, %c0_12], %13 {strides = array<i32>} : memref<16x128xf32, #tpu.memory_space<vmem>>, vector<16x128xf32>,
    return
  }
  func.func @transform_0(%arg0: i32) -> (i32, i32) {
    %c0_i32 = arith.constant 0 : i32
    %c0_i32_0 = arith.constant 0 : i32
    return %arg0, %c0_i32 : i32, i32
  }
  func.func @transform_1(%arg0: i32) -> (i32, i32) {
    %c0_i32 = arith.constant 0 : i32
    %c0_i32_0 = arith.constant 0 : i32
    %c0_i32_1 = arith.constant 0 : i32
    return %c0_i32, %c0_i32_0 : i32, i32
  }
  func.func @transform_2(%arg0: i32) -> (i32, i32) {
    %c0_i32 = arith.constant 0 : i32
    %c0_i32_0 = arith.constant 0 : i32
    %c0_i32_1 = arith.constant 0 : i32
    return %c0_i32, %c0_i32_0 : i32, i32
  }
  func.func @transform_3(%arg0: i32) -> (i32, i32) {
    %c0_i32 = arith.constant 0 : i32
    %c0_i32_0 = arith.constant 0 : i32
    %c0_i32_1 = arith.constant 0 : i32
    return %c0_i32, %c0_i32_0 : i32, i32
  }
  func.func @transform_4(%arg0: i32) -> (i32, i32) {
    %c0_i32 = arith.constant 0 : i32
    %c0_i32_0 = arith.constant 0 : i32
    return %arg0, %c0_i32 : i32, i32
  }
}

module attributes {stable_mosaic.version = 11 : i64} {
  func.func @kernel(%arg0: i32, %arg1: memref<16x784xf32, #tpu.memory_space<vmem>>, %arg2: memref<784x128xbf16, #tpu.memory_space<vmem>>, %arg3: memref<128x128xbf16, #tpu.memory_space<vmem>>, %arg4: memref<128x128xbf16, #tpu.memory_space<vmem>>, %arg5: memref<16x128xf32, #tpu.memory_space<vmem>>) attributes {dimension_semantics = [#tpu.dimension_semantics<parallel>], iteration_bounds = array<i64: 1>, scalar_prefetch = 0 : i64, scratch_operands = 0 : i64, tpu.core_type = #tpu.core_type<tc>, window_params = [{transform_indices = @transform_0, window_bounds = array<i64: 16, 784>}, {pipeline_mode = #tpu.pipeline_mode<synchronous>, transform_indices = @transform_1, window_bounds = array<i64: 784, 128>}, {pipeline_mode = #tpu.pipeline_mode<synchronous>, transform_indices = @transform_2, window_bounds = array<i64: 128, 128>}, {pipeline_mode = #tpu.pipeline_mode<synchronous>, transform_indices = @transform_3, window_bounds = array<i64: 128, 128>}, {transform_indices = @transform_4, window_bounds = array<i64: 16, 128>}]} {
    %c0 = arith.constant 0 : index
    %c0_0 = arith.constant 0 : index
    %0 = vector.load %arg1[%c0, %c0_0] : memref<16x784xf32, #tpu.memory_space<vmem>>, vector<16x784xf32>
    %1 = arith.truncf %0 : vector<16x784xf32> to vector<16x784xbf16>
    %c0_1 = arith.constant 0 : index
    %c0_2 = arith.constant 0 : index
    %2 = vector.load %arg2[%c0_1, %c0_2] : memref<784x128xbf16, #tpu.memory_space<vmem>>, vector<784x128xbf16>
    %cst = arith.constant dense<0.000000e+00> : vector<16x128xf32>
    %3 = tpu.matmul %1, %2, %cst {dimension_numbers = #tpu.dot_dimension_numbers<[1], [0], [0], [1], [0, 0, 1, 1], [], []>} : vector<16x784xbf16>, vector<784x128xbf16>, vector<16x128xf32> -> vector<16x128xf32>
    %cst_3 = arith.constant 0.000000e+00 : f32
    %4 = vector.broadcast %cst_3 : f32 to vector<16x128xf32>
    %5 = arith.maximumf %3, %4 : vector<16x128xf32>
    %6 = arith.truncf %5 : vector<16x128xf32> to vector<16x128xbf16>
    %c0_4 = arith.constant 0 : index
    %c0_5 = arith.constant 0 : index
    %7 = vector.load %arg3[%c0_4, %c0_5] : memref<128x128xbf16, #tpu.memory_space<vmem>>, vector<128x128xbf16>
    %cst_6 = arith.constant dense<0.000000e+00> : vector<16x128xf32>
    %8 = tpu.matmul %6, %7, %cst_6 {dimension_numbers = #tpu.dot_dimension_numbers<[1], [0], [0], [1], [0, 0, 1, 1], [], []>} : vector<16x128xbf16>, vector<128x128xbf16>, vector<16x128xf32> -> vector<16x128xf32>
    %cst_7 = arith.constant 0.000000e+00 : f32
    %9 = vector.broadcast %cst_7 : f32 to vector<16x128xf32>
    %10 = arith.maximumf %8, %9 : vector<16x128xf32>
    %11 = arith.truncf %10 : vector<16x128xf32> to vector<16x128xbf16>
    %c0_8 = arith.constant 0 : index
    %c0_9 = arith.constant 0 : index
    %12 = vector.load %arg4[%c0_8, %c0_9] : memref<128x128xbf16, #tpu.memory_space<vmem>>, vector<128x128xbf16>
    %cst_10 = arith.constant dense<0.000000e+00> : vector<16x128xf32>
    %13 = tpu.matmul %11, %12, %cst_10 {dimension_numbers = #tpu.dot_dimension_numbers<[1], [0], [0], [1], [0, 0, 1, 1], [], []>} : vector<16x128xbf16>, vector<128x128xbf16>, vector<16x128xf32> -> vector<16x128xf32>
    %c0_11 = arith.constant 0 : index
    %c0_12 = arith.constant 0 : index
    %14 = vector.load %arg5[%c0_11, %c0_12] : memref<16x128xf32, #tpu.memory_space<vmem>>, vector<16x128xf32>
    tpu.vector_store %arg5[%c0_11, %c0_12], %13 {strides = array<i32>} : memref<16x128xf32, #tpu.memory_space<vmem>>, vector<16x128xf32>,
    return
  }
  func.func @transform_0(%arg0: i32) -> (i32, i32) {
    %c0_i32 = arith.constant 0 : i32
    %c0_i32_0 = arith.constant 0 : i32
    return %arg0, %c0_i32 : i32, i32
  }
  func.func @transform_1(%arg0: i32) -> (i32, i32) {
    %c0_i32 = arith.constant 0 : i32
    %c0_i32_0 = arith.constant 0 : i32
    %c0_i32_1 = arith.constant 0 : i32
    return %c0_i32, %c0_i32_0 : i32, i32
  }
  func.func @transform_2(%arg0: i32) -> (i32, i32) {
    %c0_i32 = arith.constant 0 : i32
    %c0_i32_0 = arith.constant 0 : i32
    %c0_i32_1 = arith.constant 0 : i32
    return %c0_i32, %c0_i32_0 : i32, i32
  }
  func.func @transform_3(%arg0: i32) -> (i32, i32) {
    %c0_i32 = arith.constant 0 : i32
    %c0_i32_0 = arith.constant 0 : i32
    %c0_i32_1 = arith.constant 0 : i32
    return %c0_i32, %c0_i32_0 : i32, i32
  }
  func.func @transform_4(%arg0: i32) -> (i32, i32) {
    %c0_i32 = arith.constant 0 : i32
    %c0_i32_0 = arith.constant 0 : i32
    return %arg0, %c0_i32 : i32, i32
  }
}

</mosaic_0001>

<llo_original>
// kernel: tpu_custom_call.1
$region0: #{tpu_custom_call.1}
  #allocation0 [shape = 'u32[]', space=smem, size = 0x4, offset = 0x4, fixed_abs, tag = 'smem constant byte address 0x4 - core index']
  #allocation1 [shape = 'u32[144,128]{1,0:T(1,128)}', space=vmem, size = 0x12000, scoped, tag = 'internal scratch']
  %s0 = inlined_call_operand.hbm [shape: f32[16,784], index: 0, kind: input, shape index: {}]
  %s1 = inlined_call_operand.hbm [shape: bf16[784,128], index: 1, kind: input, shape index: {}]
  %s2 = inlined_call_operand.hbm [shape: bf16[128,128], index: 2, kind: input, shape index: {}]
  %s3 = inlined_call_operand.hbm [shape: bf16[128,128], index: 3, kind: input, shape index: {}]
  %s4 = inlined_call_operand.hbm [shape: f32[16,128], index: 4, kind: output, shape index: {}]
  %s5 = sld [smem:[#allocation0]]
  $region42: #{tpu_custom_call.1} parent=0
    _
  %s7 = ssub.s32 1, %s5
  %s8 = scalar_select 0, %s7, %s5
  $region1: #{tpu_custom_call.1} parent=0
    #allocation2 [shape = 'u8[57344]{0}', space=vmem, size = 0xe000, scoped, tag = 'input window, operand 0, single buffered']
    #allocation3 [shape = 's32[1]{0}', space=sflag, size = 0x4, scoped, tag = 'scoped memory for tpu_custom_call.1']
    #allocation4 [shape = 's32[1]{0}', space=sflag, size = 0x4, scoped, tag = 'scoped memory for tpu_custom_call.1']
    #allocation5 [shape = 'u8[200704]{0}', space=vmem, size = 0x31000, scoped, tag = 'input window, operand 1, single buffered']
    #allocation6 [shape = 's32[1]{0}', space=sflag, size = 0x4, scoped, tag = 'scoped memory for tpu_custom_call.1']
    #allocation7 [shape = 'u8[32768]{0}', space=vmem, size = 0x8000, scoped, tag = 'input window, operand 2, single buffered']
    #allocation8 [shape = 'u8[32768]{0}', space=vmem, size = 0x8000, scoped, tag = 'input window, operand 3, single buffered']
    #allocation9 [shape = 's32[1]{0}', space=sflag, size = 0x4, scoped, tag = 'scoped memory for tpu_custom_call.1']
    #allocation10 [shape = 'u8[8192]{0}', space=vmem, size = 0x2000, scoped, tag = 'output window, operand 0, single buffered']
    %9 = vsyncpa [#allocation3], 0
    %10 = vsyncpa [#allocation6], 0
    %11 = vsyncpa [#allocation9], 0
    %12 = vsyncpa [#allocation4], 0
    // Predicated region
    $region2: #{tpu_custom_call.1} parent=1 // pred_check
      _
    $region3: #{tpu_custom_call.1} parent=1 // pred_check_branch
      %14 = sbr.rel (0) target = $region5
    $region4: #{tpu_custom_call.1} parent=1 // pred_region
      %s16 = ssub.s32 1792, 1792
      %17 = vsyncadd [#allocation3], %s16
      %s18 = sshll.u32 [#allocation2], 4
      %s19 = int_to_ptr.vmem [resolvable:$true] %s18
      %24 = dma.hbm_to_vmem [thread:$0]  %s0, 1792, %s19, [#allocation3], 896, 896, 56
    $region5: #{tpu_custom_call.1} parent=1 // pred_fallthru
      _
    // Predicated region
    $region6: #{tpu_custom_call.1} parent=1 // pred_check
      _
    $region7: #{tpu_custom_call.1} parent=1 // pred_check_branch
      %26 = sbr.rel (0) target = $region9
    $region8: #{tpu_custom_call.1} parent=1 // pred_region
      %s28 = ssub.s32 6272, 6272
      %29 = vsyncadd [#allocation6], %s28
      %s30 = sshll.u32 [#allocation5], 4
      %s31 = int_to_ptr.vmem [resolvable:$true] %s30
      %36 = dma.hbm_to_vmem [thread:$0]  %s1, 6272, %s31, [#allocation6], 64, 64, 4
    $region9: #{tpu_custom_call.1} parent=1 // pred_fallthru
      _
    // Predicated region
    $region10: #{tpu_custom_call.1} parent=1 // pred_check
      _
    $region11: #{tpu_custom_call.1} parent=1 // pred_check_branch
      %38 = sbr.rel (0) target = $region13
    $region12: #{tpu_custom_call.1} parent=1 // pred_region
      %s40 = ssub.s32 1024, 1024
      %41 = vsyncadd [#allocation6], %s40
      %s42 = sshll.u32 [#allocation7], 4
      %s43 = int_to_ptr.vmem [resolvable:$true] %s42
      %48 = dma.hbm_to_vmem [thread:$0]  %s2, 1024, %s43, [#allocation6], 64, 64, 4
    $region13: #{tpu_custom_call.1} parent=1 // pred_fallthru
      _
    // Predicated region
    $region14: #{tpu_custom_call.1} parent=1 // pred_check
      _
    $region15: #{tpu_custom_call.1} parent=1 // pred_check_branch
      %50 = sbr.rel (0) target = $region17
    $region16: #{tpu_custom_call.1} parent=1 // pred_region
      %s52 = ssub.s32 1024, 1024
      %53 = vsyncadd [#allocation9], %s52
      %s54 = sshll.u32 [#allocation8], 4
      %s55 = int_to_ptr.vmem [resolvable:$true] %s54
      %60 = dma.hbm_to_vmem [thread:$0]  %s3, 1024, %s55, [#allocation9], 64, 64, 4
    $region17: #{tpu_custom_call.1} parent=1 // pred_fallthru
      _
    // Predicated region
    $region18: #{tpu_custom_call.1} parent=1 // pred_check
      _
    $region19: #{tpu_custom_call.1} parent=1 // pred_check_branch
      %62 = sbr.rel (0) target = $region21
    $region20: #{tpu_custom_call.1} parent=1 // pred_region
      %63 = dma.done [#allocation3], 1792
    $region21: #{tpu_custom_call.1} parent=1 // pred_fallthru
      _
    // Predicated region
    $region22: #{tpu_custom_call.1} parent=1 // pred_check
      _
    $region23: #{tpu_custom_call.1} parent=1 // pred_check_branch
      %65 = sbr.rel (0) target = $region25
    $region24: #{tpu_custom_call.1} parent=1 // pred_region
      %66 = dma.done [#allocation6], 6272
    $region25: #{tpu_custom_call.1} parent=1 // pred_fallthru
      _
    // Predicated region
    $region26: #{tpu_custom_call.1} parent=1 // pred_check
      _
    $region27: #{tpu_custom_call.1} parent=1 // pred_check_branch
      %68 = sbr.rel (0) target = $region29
    $region28: #{tpu_custom_call.1} parent=1 // pred_region
      %69 = dma.done [#allocation6], 1024
    $region29: #{tpu_custom_call.1} parent=1 // pred_fallthru
      _
    // Predicated region
    $region30: #{tpu_custom_call.1} parent=1 // pred_check
      _
    $region31: #{tpu_custom_call.1} parent=1 // pred_check_branch
      %71 = sbr.rel (0) target = $region33
    $region32: #{tpu_custom_call.1} parent=1 // pred_region
      %72 = dma.done [#allocation9], 1024
    $region33: #{tpu_custom_call.1} parent=1 // pred_fallthru
      _
    %v74 = vld [vmem:[#allocation2] sm:$0xff]
    %v75 = vld [vmem:[#allocation2 + $0x8] sm:$0xff]
    %v76 = vld [vmem:[#allocation2 + $0x10] sm:$0xff]
    %v77 = vld [vmem:[#allocation2 + $0x18] sm:$0xff]
    %v78 = vld [vmem:[#allocation2 + $0x20] sm:$0xff]
    %v79 = vld [vmem:[#allocation2 + $0x28] sm:$0xff]
    %v80 = vld [vmem:[#allocation2 + $0x30] sm:$0xff]
    %v81 = vld [vmem:[#allocation2 + $0x38] sm:$0xff]
    %v82 = vld [vmem:[#allocation2 + $0x40] sm:$0xff]
    %v83 = vld [vmem:[#allocation2 + $0x48] sm:$0xff]
    %v84 = vld [vmem:[#allocation2 + $0x50] sm:$0xff]
    %v85 = vld [vmem:[#allocation2 + $0x58] sm:$0xff]
    %v86 = vld [vmem:[#allocation2 + $0x60] sm:$0xff]
    %v87 = vld [vmem:[#allocation2 + $0x68] sm:$0xff]
    %v88 = vpack.c.bf16 %v81, %v74
    %v89 = vpack.c.bf16 %v82, %v75
    %v90 = vpack.c.bf16 %v83, %v76
    %v91 = vpack.c.bf16 %v84, %v77
    %v92 = vpack.c.bf16 %v85, %v78
    %v93 = vpack.c.bf16 %v86, %v79
    %v94 = vpack.c.bf16 %v87, %v80
    %v95 = vld [vmem:[#allocation5] sm:$0xf]
    %v96 = vld [vmem:[#allocation5 + $0x4] sm:$0xf]
    %v97 = vld [vmem:[#allocation5 + $0x8] sm:$0xf]
    %v98 = vld [vmem:[#allocation5 + $0xc] sm:$0xf]
    %v99 = vld [vmem:[#allocation5 + $0x10] sm:$0xf]
    %v100 = vld [vmem:[#allocation5 + $0x14] sm:$0xf]
    %v101 = vld [vmem:[#allocation5 + $0x18] sm:$0xf]
    %v102 = vld [vmem:[#allocation5 + $0x1c] sm:$0xf]
    %v103 = vld [vmem:[#allocation5 + $0x20] sm:$0xf]
    %v104 = vld [vmem:[#allocation5 + $0x24] sm:$0xf]
    %v105 = vld [vmem:[#allocation5 + $0x28] sm:$0xf]
    %v106 = vld [vmem:[#allocation5 + $0x2c] sm:$0xf]
    %v107 = vld [vmem:[#allocation5 + $0x30] sm:$0xf]
    %v108 = vld [vmem:[#allocation5 + $0x34] sm:$0xf]
    %v109 = vld [vmem:[#allocation5 + $0x38] sm:$0xf]
    %v110 = vld [vmem:[#allocation5 + $0x3c] sm:$0xf]
    %v111 = vld [vmem:[#allocation5 + $0x40] sm:$0xf]
    %v112 = vld [vmem:[#allocation5 + $0x44] sm:$0xf]
    %v113 = vld [vmem:[#allocation5 + $0x48] sm:$0xf]
    %v114 = vld [vmem:[#allocation5 + $0x4c] sm:$0xf]
    %v115 = vld [vmem:[#allocation5 + $0x50] sm:$0xf]
    %v116 = vld [vmem:[#allocation5 + $0x54] sm:$0xf]
    %v117 = vld [vmem:[#allocation5 + $0x58] sm:$0xf]
    %v118 = vld [vmem:[#allocation5 + $0x5c] sm:$0xf]
    %v119 = vld [vmem:[#allocation5 + $0x60] sm:$0xf]
    %v120 = vld [vmem:[#allocation5 + $0x64] sm:$0xf]
    %v121 = vld [vmem:[#allocation5 + $0x68] sm:$0xf]
    %v122 = vld [vmem:[#allocation5 + $0x6c] sm:$0xf]
    %v123 = vld [vmem:[#allocation5 + $0x70] sm:$0xf]
    %v124 = vld [vmem:[#allocation5 + $0x74] sm:$0xf]
    %v125 = vld [vmem:[#allocation5 + $0x78] sm:$0xf]
    %v126 = vld [vmem:[#allocation5 + $0x7c] sm:$0xf]
    %v127 = vld [vmem:[#allocation5 + $0x80] sm:$0xf]
    %v128 = vld [vmem:[#allocation5 + $0x84] sm:$0xf]
    %v129 = vld [vmem:[#allocation5 + $0x88] sm:$0xf]
    %v130 = vld [vmem:[#allocation5 + $0x8c] sm:$0xf]
    %v131 = vld [vmem:[#allocation5 + $0x90] sm:$0xf]
    %v132 = vld [vmem:[#allocation5 + $0x94] sm:$0xf]
    %v133 = vld [vmem:[#allocation5 + $0x98] sm:$0xf]
    %v134 = vld [vmem:[#allocation5 + $0x9c] sm:$0xf]
    %v135 = vld [vmem:[#allocation5 + $0xa0] sm:$0xf]
    %v136 = vld [vmem:[#allocation5 + $0xa4] sm:$0xf]
    %v137 = vld [vmem:[#allocation5 + $0xa8] sm:$0xf]
    %v138 = vld [vmem:[#allocation5 + $0xac] sm:$0xf]
    %v139 = vld [vmem:[#allocation5 + $0xb0] sm:$0xf]
    %v140 = vld [vmem:[#allocation5 + $0xb4] sm:$0xf]
    %v141 = vld [vmem:[#allocation5 + $0xb8] sm:$0xf]
    %v142 = vld [vmem:[#allocation5 + $0xbc] sm:$0xf]
    %v143 = vld [vmem:[#allocation5 + $0xc0] sm:$0xf]
    %v144 = vld [vmem:[#allocation5 + $0xc4] sm:$0xf]
    %v145 = vld [vmem:[#allocation5 + $0xc8] sm:$0xf]
    %v146 = vld [vmem:[#allocation5 + $0xcc] sm:$0xf]
    %v147 = vld [vmem:[#allocation5 + $0xd0] sm:$0xf]
    %v148 = vld [vmem:[#allocation5 + $0xd4] sm:$0xf]
    %v149 = vld [vmem:[#allocation5 + $0xd8] sm:$0xf]
    %v150 = vld [vmem:[#allocation5 + $0xdc] sm:$0xf]
    %v151 = vld [vmem:[#allocation5 + $0xe0] sm:$0xf]
    %v152 = vld [vmem:[#allocation5 + $0xe4] sm:$0xf]
    %v153 = vld [vmem:[#allocation5 + $0xe8] sm:$0xf]
    %v154 = vld [vmem:[#allocation5 + $0xec] sm:$0xf]
    %v155 = vld [vmem:[#allocation5 + $0xf0] sm:$0xf]
    %v156 = vld [vmem:[#allocation5 + $0xf4] sm:$0xf]
    %v157 = vld [vmem:[#allocation5 + $0xf8] sm:$0xf]
    %v158 = vld [vmem:[#allocation5 + $0xfc] sm:$0xf]
    %v159 = vld [vmem:[#allocation5 + $0x100] sm:$0xf]
    %v160 = vld [vmem:[#allocation5 + $0x104] sm:$0xf]
    %v161 = vld [vmem:[#allocation5 + $0x108] sm:$0xf]
    %v162 = vld [vmem:[#allocation5 + $0x10c] sm:$0xf]
    %v163 = vld [vmem:[#allocation5 + $0x110] sm:$0xf]
    %v164 = vld [vmem:[#allocation5 + $0x114] sm:$0xf]
    %v165 = vld [vmem:[#allocation5 + $0x118] sm:$0xf]
    %v166 = vld [vmem:[#allocation5 + $0x11c] sm:$0xf]
    %v167 = vld [vmem:[#allocation5 + $0x120] sm:$0xf]
    %v168 = vld [vmem:[#allocation5 + $0x124] sm:$0xf]
    %v169 = vld [vmem:[#allocation5 + $0x128] sm:$0xf]
    %v170 = vld [vmem:[#allocation5 + $0x12c] sm:$0xf]
    %v171 = vld [vmem:[#allocation5 + $0x130] sm:$0xf]
    %v172 = vld [vmem:[#allocation5 + $0x134] sm:$0xf]
    %v173 = vld [vmem:[#allocation5 + $0x138] sm:$0xf]
    %v174 = vld [vmem:[#allocation5 + $0x13c] sm:$0xf]
    %v175 = vld [vmem:[#allocation5 + $0x140] sm:$0xf]
    %v176 = vld [vmem:[#allocation5 + $0x144] sm:$0xf]
    %v177 = vld [vmem:[#allocation5 + $0x148] sm:$0xf]
    %v178 = vld [vmem:[#allocation5 + $0x14c] sm:$0xf]
    %v179 = vld [vmem:[#allocation5 + $0x150] sm:$0xf]
    %v180 = vld [vmem:[#allocation5 + $0x154] sm:$0xf]
    %v181 = vld [vmem:[#allocation5 + $0x158] sm:$0xf]
    %v182 = vld [vmem:[#allocation5 + $0x15c] sm:$0xf]
    %v183 = vld [vmem:[#allocation5 + $0x160] sm:$0xf]
    %v184 = vld [vmem:[#allocation5 + $0x164] sm:$0xf]
    %v185 = vld [vmem:[#allocation5 + $0x168] sm:$0xf]
    %v186 = vld [vmem:[#allocation5 + $0x16c] sm:$0xf]
    %v187 = vld [vmem:[#allocation5 + $0x170] sm:$0xf]
    %v188 = vld [vmem:[#allocation5 + $0x174] sm:$0xf]
    %v189 = vld [vmem:[#allocation5 + $0x178] sm:$0xf]
    %v190 = vld [vmem:[#allocation5 + $0x17c] sm:$0xf]
    %v191 = vld [vmem:[#allocation5 + $0x180] sm:$0xf]
    %v192 = vld [vmem:[#allocation5 + $0x184] sm:$0xf]
    %v291 = vunpack.c.l.b16 %v95
    %v292 = vunpack.c.l.b16 %v96
    %v293 = vunpack.c.l.b16 %v97
    %v294 = vunpack.c.l.b16 %v98
    %v295 = vunpack.c.l.b16 %v99
    %v296 = vunpack.c.l.b16 %v100
    %v297 = vunpack.c.l.b16 %v101
    %v298 = vunpack.c.l.b16 %v102
    %v299 = vunpack.c.l.b16 %v103
    %v300 = vunpack.c.l.b16 %v104
    %v301 = vunpack.c.l.b16 %v105
    %v302 = vunpack.c.l.b16 %v106
    %v303 = vunpack.c.l.b16 %v107
    %v304 = vunpack.c.l.b16 %v108
    %v305 = vunpack.c.l.b16 %v109
    %v306 = vunpack.c.l.b16 %v110
    %v307 = vunpack.c.l.b16 %v111
    %v308 = vunpack.c.l.b16 %v112
    %v309 = vunpack.c.l.b16 %v113
    %v310 = vunpack.c.l.b16 %v114
    %v311 = vunpack.c.l.b16 %v115
    %v312 = vunpack.c.l.b16 %v116
    %v313 = vunpack.c.l.b16 %v117
    %v314 = vunpack.c.l.b16 %v118
    %v315 = vunpack.c.l.b16 %v119
    %v316 = vunpack.c.l.b16 %v120
    %v317 = vunpack.c.l.b16 %v121
    %v318 = vunpack.c.l.b16 %v122
    %v319 = vunpack.c.l.b16 %v123
    %v320 = vunpack.c.l.b16 %v124
    %v321 = vunpack.c.l.b16 %v125
    %v322 = vunpack.c.l.b16 %v126
    %v323 = vunpack.c.l.b16 %v127
    %v324 = vunpack.c.l.b16 %v128
    %v325 = vunpack.c.l.b16 %v129
    %v326 = vunpack.c.l.b16 %v130
    %v327 = vunpack.c.l.b16 %v131
    %v328 = vunpack.c.l.b16 %v132
    %v329 = vunpack.c.l.b16 %v133
    %v330 = vunpack.c.l.b16 %v134
    %v331 = vunpack.c.l.b16 %v135
    %v332 = vunpack.c.l.b16 %v136
    %v333 = vunpack.c.l.b16 %v137
    %v334 = vunpack.c.l.b16 %v138
    %v335 = vunpack.c.l.b16 %v139
    %v336 = vunpack.c.l.b16 %v140
    %v337 = vunpack.c.l.b16 %v141
    %v338 = vunpack.c.l.b16 %v142
    %v339 = vunpack.c.l.b16 %v143
    %v340 = vunpack.c.l.b16 %v144
    %v341 = vunpack.c.l.b16 %v145
    %v342 = vunpack.c.l.b16 %v146
    %v343 = vunpack.c.l.b16 %v147
    %v344 = vunpack.c.l.b16 %v148
    %v345 = vunpack.c.l.b16 %v149
    %v346 = vunpack.c.l.b16 %v150
    %v347 = vunpack.c.l.b16 %v151
    %v348 = vunpack.c.l.b16 %v152
    %v349 = vunpack.c.l.b16 %v153
    %v350 = vunpack.c.l.b16 %v154
    %v351 = vunpack.c.l.b16 %v155
    %v352 = vunpack.c.l.b16 %v156
    %v353 = vunpack.c.l.b16 %v157
    %v354 = vunpack.c.l.b16 %v158
    %v355 = vunpack.c.l.b16 %v159
    %v356 = vunpack.c.l.b16 %v160
    %v357 = vunpack.c.l.b16 %v161
    %v358 = vunpack.c.l.b16 %v162
    %v359 = vunpack.c.l.b16 %v163
    %v360 = vunpack.c.l.b16 %v164
    %v361 = vunpack.c.l.b16 %v165
    %v362 = vunpack.c.l.b16 %v166
    %v363 = vunpack.c.l.b16 %v167
    %v364 = vunpack.c.l.b16 %v168
    %v365 = vunpack.c.l.b16 %v169
    %v366 = vunpack.c.l.b16 %v170
    %v367 = vunpack.c.l.b16 %v171
    %v368 = vunpack.c.l.b16 %v172
    %v369 = vunpack.c.l.b16 %v173
    %v370 = vunpack.c.l.b16 %v174
    %v371 = vunpack.c.l.b16 %v175
    %v372 = vunpack.c.l.b16 %v176
    %v373 = vunpack.c.l.b16 %v177
    %v374 = vunpack.c.l.b16 %v178
    %v375 = vunpack.c.l.b16 %v179
    %v376 = vunpack.c.l.b16 %v180
    %v377 = vunpack.c.l.b16 %v181
    %v378 = vunpack.c.l.b16 %v182
    %v379 = vunpack.c.l.b16 %v183
    %v380 = vunpack.c.l.b16 %v184
    %v381 = vunpack.c.l.b16 %v185
    %v382 = vunpack.c.l.b16 %v186
    %v383 = vunpack.c.l.b16 %v187
    %v384 = vunpack.c.l.b16 %v188
    %v385 = vunpack.c.l.b16 %v189
    %v386 = vunpack.c.l.b16 %v190
    %v387 = vunpack.c.l.b16 %v191
    %v388 = vunpack.c.l.b16 %v192
    %v389 = vpack.c.b16 %v292, %v291
    %v390 = vpack.c.b16 %v294, %v293
    %v391 = vpack.c.b16 %v296, %v295
    %v392 = vpack.c.b16 %v298, %v297
    %v393 = vpack.c.b16 %v300, %v299
    %v394 = vpack.c.b16 %v302, %v301
    %v395 = vpack.c.b16 %v304, %v303
    %v396 = vpack.c.b16 %v306, %v305
    %v397 = vpack.c.b16 %v308, %v307
    %v398 = vpack.c.b16 %v310, %v309
    %v399 = vpack.c.b16 %v312, %v311
    %v400 = vpack.c.b16 %v314, %v313
    %v401 = vpack.c.b16 %v316, %v315
    %v402 = vpack.c.b16 %v318, %v317
    %v403 = vpack.c.b16 %v320, %v319
    %v404 = vpack.c.b16 %v322, %v321
    %v405 = vpack.c.b16 %v324, %v323
    %v406 = vpack.c.b16 %v326, %v325
    %v407 = vpack.c.b16 %v328, %v327
    %v408 = vpack.c.b16 %v330, %v329
    %v409 = vpack.c.b16 %v332, %v331
    %v410 = vpack.c.b16 %v334, %v333
    %v411 = vpack.c.b16 %v336, %v335
    %v412 = vpack.c.b16 %v338, %v337
    %v413 = vpack.c.b16 %v340, %v339
    %v414 = vpack.c.b16 %v342, %v341
    %v415 = vpack.c.b16 %v344, %v343
    %v416 = vpack.c.b16 %v346, %v345
    %v417 = vpack.c.b16 %v348, %v347
    %v418 = vpack.c.b16 %v350, %v349
    %v419 = vpack.c.b16 %v352, %v351
    %v420 = vpack.c.b16 %v354, %v353
    %v421 = vpack.c.b16 %v356, %v355
    %v422 = vpack.c.b16 %v358, %v357
    %v423 = vpack.c.b16 %v360, %v359
    %v424 = vpack.c.b16 %v362, %v361
    %v425 = vpack.c.b16 %v364, %v363
    %v426 = vpack.c.b16 %v366, %v365
    %v427 = vpack.c.b16 %v368, %v367
    %v428 = vpack.c.b16 %v370, %v369
    %v429 = vpack.c.b16 %v372, %v371
    %v430 = vpack.c.b16 %v374, %v373
    %v431 = vpack.c.b16 %v376, %v375
    %v432 = vpack.c.b16 %v378, %v377
    %v433 = vpack.c.b16 %v380, %v379
    %v434 = vpack.c.b16 %v382, %v381
    %v435 = vpack.c.b16 %v384, %v383
    %v436 = vpack.c.b16 %v386, %v385
    %v437 = vpack.c.b16 %v388, %v387
    %vm487 = vcmask 130048
    %v489 = vsel %vm487, %v94, 0
    %491 = vmatprep.subr.bf16.mxu0 0
    %492 = vmatpush1.bf16.msra.mxu0 %v389
    %493 = vmatprep.subr.bf16.mxu0 0
    %494 = vmatpush1.bf16.msra.mxu0 %v390
    %495 = vmatprep.subr.bf16.mxu0 0
    %496 = vmatpush1.bf16.msra.mxu0 %v391
    %497 = vmatprep.subr.bf16.mxu0 0
    %498 = vmatpush1.bf16.msra.mxu0 %v392
    %499 = vmatprep.subr.bf16.mxu0 0
    %500 = vmatpush1.bf16.msra.mxu0 %v393
    %501 = vmatprep.subr.bf16.mxu0 0
    %502 = vmatpush1.bf16.msra.mxu0 %v394
    %503 = vmatprep.subr.bf16.mxu0 0
    %504 = vmatpush1.bf16.msra.mxu0 %v395
    %505 = vmatprep.subr.bf16.mxu0 0
    %506 = vmatpush1.bf16.msra.mxu0 %v396
    %507 = vmatprep.subr.bf16.mxu0 0
    %508 = vmatpush1.bf16.msra.mxu0 %v397
    %509 = vmatprep.subr.bf16.mxu0 0
    %510 = vmatpush1.bf16.msra.mxu0 %v398
    %511 = vmatprep.subr.bf16.mxu0 0
    %512 = vmatpush1.bf16.msra.mxu0 %v399
    %513 = vmatprep.subr.bf16.mxu0 0
    %514 = vmatpush1.bf16.msra.mxu0 %v400
    %515 = vmatprep.subr.bf16.mxu0 0
    %516 = vmatpush1.bf16.msra.mxu0 %v401
    %517 = vmatprep.subr.bf16.mxu0 0
    %518 = vmatpush1.bf16.msra.mxu0 %v402
    %519 = vmatprep.subr.bf16.mxu0 0
    %520 = vmatpush1.bf16.msra.mxu0 %v403
    %521 = vmatprep.subr.bf16.mxu0 0
    %522 = vmatpush1.bf16.msra.mxu0 %v404
    %523 = vmatprep.mubr.bf16.mxu0 %v89
    %524 = vmatmul.mubr.bf16.gmra.mrb[0].mxu0 %v88
    %v525 = vpop.f32.mrb[0].mxu0
    %v526 = vadd.f32 0.0, %v525
    %v527 = vpop.f32.mrb[0].mxu0
    %v528 = vpop.f32.mrb[0].mxu0
    %v529 = vadd.f32 0.0, %v528
    %v530 = vpop.f32.mrb[0].mxu0
    %531 = vdwg.mxu0
    %532 = vmatprep.subr.bf16.mxu0 0
    %533 = vmatpush1.bf16.msra.mxu0 %v405
    %534 = vmatprep.subr.bf16.mxu0 0
    %535 = vmatpush1.bf16.msra.mxu0 %v406
    %536 = vmatprep.subr.bf16.mxu0 0
    %537 = vmatpush1.bf16.msra.mxu0 %v407
    %538 = vmatprep.subr.bf16.mxu0 0
    %539 = vmatpush1.bf16.msra.mxu0 %v408
    %540 = vmatprep.subr.bf16.mxu0 0
    %541 = vmatpush1.bf16.msra.mxu0 %v409
    %542 = vmatprep.subr.bf16.mxu0 0
    %543 = vmatpush1.bf16.msra.mxu0 %v410
    %544 = vmatprep.subr.bf16.mxu0 0
    %545 = vmatpush1.bf16.msra.mxu0 %v411
    %546 = vmatprep.subr.bf16.mxu0 0
    %547 = vmatpush1.bf16.msra.mxu0 %v412
    %548 = vmatprep.subr.bf16.mxu0 0
    %549 = vmatpush1.bf16.msra.mxu0 %v413
    %550 = vmatprep.subr.bf16.mxu0 0
    %551 = vmatpush1.bf16.msra.mxu0 %v414
    %552 = vmatprep.subr.bf16.mxu0 0
    %553 = vmatpush1.bf16.msra.mxu0 %v415
    %554 = vmatprep.subr.bf16.mxu0 0
    %555 = vmatpush1.bf16.msra.mxu0 %v416
    %556 = vmatprep.subr.bf16.mxu0 0
    %557 = vmatpush1.bf16.msra.mxu0 %v417
    %558 = vmatprep.subr.bf16.mxu0 0
    %559 = vmatpush1.bf16.msra.mxu0 %v418
    %560 = vmatprep.subr.bf16.mxu0 0
    %561 = vmatpush1.bf16.msra.mxu0 %v419
    %562 = vmatprep.subr.bf16.mxu0 0
    %563 = vmatpush1.bf16.msra.mxu0 %v420
    %564 = vmatprep.mubr.bf16.mxu0 %v91
    %565 = vmatmul.mubr.bf16.gmra.mrb[0].mxu0 %v90
    %v566 = vpop.f32.mrb[0].mxu0
    %v567 = vadd.f32 %v526, %v566
    %v568 = vpop.f32.mrb[0].mxu0
    %v569 = vpop.f32.mrb[0].mxu0
    %v570 = vadd.f32 %v529, %v569
    %v571 = vpop.f32.mrb[0].mxu0
    %572 = vdwg.mxu0
    %573 = vmatprep.subr.bf16.mxu0 0
    %574 = vmatpush1.bf16.msra.mxu0 %v421
    %575 = vmatprep.subr.bf16.mxu0 0
    %576 = vmatpush1.bf16.msra.mxu0 %v422
    %577 = vmatprep.subr.bf16.mxu0 0
    %578 = vmatpush1.bf16.msra.mxu0 %v423
    %579 = vmatprep.subr.bf16.mxu0 0
    %580 = vmatpush1.bf16.msra.mxu0 %v424
    %581 = vmatprep.subr.bf16.mxu0 0
    %582 = vmatpush1.bf16.msra.mxu0 %v425
    %583 = vmatprep.subr.bf16.mxu0 0
    %584 = vmatpush1.bf16.msra.mxu0 %v426
    %585 = vmatprep.subr.bf16.mxu0 0
    %586 = vmatpush1.bf16.msra.mxu0 %v427
    %587 = vmatprep.subr.bf16.mxu0 0
    %588 = vmatpush1.bf16.msra.mxu0 %v428
    %589 = vmatprep.subr.bf16.mxu0 0
    %590 = vmatpush1.bf16.msra.mxu0 %v429
    %591 = vmatprep.subr.bf16.mxu0 0
    %592 = vmatpush1.bf16.msra.mxu0 %v430
    %593 = vmatprep.subr.bf16.mxu0 0
    %594 = vmatpush1.bf16.msra.mxu0 %v431
    %595 = vmatprep.subr.bf16.mxu0 0
    %596 = vmatpush1.bf16.msra.mxu0 %v432
    %597 = vmatprep.subr.bf16.mxu0 0
    %598 = vmatpush1.bf16.msra.mxu0 %v433
    %599 = vmatprep.subr.bf16.mxu0 0
    %600 = vmatpush1.bf16.msra.mxu0 %v434
    %601 = vmatprep.subr.bf16.mxu0 0
    %602 = vmatpush1.bf16.msra.mxu0 %v435
    %603 = vmatprep.subr.bf16.mxu0 0
    %604 = vmatpush1.bf16.msra.mxu0 %v436
    %605 = vmatprep.mubr.bf16.mxu0 %v93
    %606 = vmatmul.mubr.bf16.gmra.mrb[0].mxu0 %v92
    %v607 = vpop.f32.mrb[0].mxu0
    %v608 = vadd.f32 %v567, %v607
    %v609 = vpop.f32.mrb[0].mxu0
    %v610 = vpop.f32.mrb[0].mxu0
    %v611 = vadd.f32 %v570, %v610
    %v612 = vpop.f32.mrb[0].mxu0
    %613 = vdwg.mxu0
    %614 = vmatprep.subr.bf16.mxu0 0
    %615 = vmatpush1.bf16.msra.mxu0 %v437
    %616 = vmatprep.subr.bf16.mxu0 0
    %617 = vmatpush1.bf16.msra.mxu0 0
    %618 = vmatprep.subr.bf16.mxu0 0
    %619 = vmatpush1.bf16.msra.mxu0 0
    %620 = vmatprep.subr.bf16.mxu0 0
    %621 = vmatpush1.bf16.msra.mxu0 0
    %622 = vmatprep.subr.bf16.mxu0 0
    %623 = vmatpush1.bf16.msra.mxu0 0
    %624 = vmatprep.subr.bf16.mxu0 0
    %625 = vmatpush1.bf16.msra.mxu0 0
    %626 = vmatprep.subr.bf16.mxu0 0
    %627 = vmatpush1.bf16.msra.mxu0 0
    %628 = vmatprep.subr.bf16.mxu0 0
    %629 = vmatpush1.bf16.msra.mxu0 0
    %630 = vmatprep.subr.bf16.mxu0 0
    %631 = vmatpush1.bf16.msra.mxu0 0
    %632 = vmatprep.subr.bf16.mxu0 0
    %633 = vmatpush1.bf16.msra.mxu0 0
    %634 = vmatprep.subr.bf16.mxu0 0
    %635 = vmatpush1.bf16.msra.mxu0 0
    %636 = vmatprep.subr.bf16.mxu0 0
    %637 = vmatpush1.bf16.msra.mxu0 0
    %638 = vmatprep.subr.bf16.mxu0 0
    %639 = vmatpush1.bf16.msra.mxu0 0
    %640 = vmatprep.subr.bf16.mxu0 0
    %641 = vmatpush1.bf16.msra.mxu0 0
    %642 = vmatprep.subr.bf16.mxu0 0
    %643 = vmatpush1.bf16.msra.mxu0 0
    %644 = vmatprep.subr.bf16.mxu0 0
    %645 = vmatpush1.bf16.msra.mxu0 0
    %646 = vmatprep.mubr.bf16.mxu0 0
    %647 = vmatmul.mubr.bf16.gmra.mrb[0].mxu0 %v489
    %v648 = vpop.f32.mrb[0].mxu0
    %v649 = vadd.f32 %v608, %v648
    %v650 = vpop.f32.mrb[0].mxu0
    %v651 = vpop.f32.mrb[0].mxu0
    %v652 = vadd.f32 %v611, %v651
    %v653 = vpop.f32.mrb[0].mxu0
    %654 = vdwg.mxu0
    %v655 = vmax.f32 %v649, 0.0
    %v656 = vmax.f32 %v652, 0.0
    %v657 = vpack.c.bf16 %v656, %v655
    %v658 = vld [vmem:[#allocation7] sm:$0xf]
    %v659 = vld [vmem:[#allocation7 + $0x4] sm:$0xf]
    %v660 = vld [vmem:[#allocation7 + $0x8] sm:$0xf]
    %v661 = vld [vmem:[#allocation7 + $0xc] sm:$0xf]
    %v662 = vld [vmem:[#allocation7 + $0x10] sm:$0xf]
    %v663 = vld [vmem:[#allocation7 + $0x14] sm:$0xf]
    %v664 = vld [vmem:[#allocation7 + $0x18] sm:$0xf]
    %v665 = vld [vmem:[#allocation7 + $0x1c] sm:$0xf]
    %v666 = vld [vmem:[#allocation7 + $0x20] sm:$0xf]
    %v667 = vld [vmem:[#allocation7 + $0x24] sm:$0xf]
    %v668 = vld [vmem:[#allocation7 + $0x28] sm:$0xf]
    %v669 = vld [vmem:[#allocation7 + $0x2c] sm:$0xf]
    %v670 = vld [vmem:[#allocation7 + $0x30] sm:$0xf]
    %v671 = vld [vmem:[#allocation7 + $0x34] sm:$0xf]
    %v672 = vld [vmem:[#allocation7 + $0x38] sm:$0xf]
    %v673 = vld [vmem:[#allocation7 + $0x3c] sm:$0xf]
    %v690 = vunpack.c.l.b16 %v658
    %v691 = vunpack.c.l.b16 %v659
    %v692 = vunpack.c.l.b16 %v660
    %v693 = vunpack.c.l.b16 %v661
    %v694 = vunpack.c.l.b16 %v662
    %v695 = vunpack.c.l.b16 %v663
    %v696 = vunpack.c.l.b16 %v664
    %v697 = vunpack.c.l.b16 %v665
    %v698 = vunpack.c.l.b16 %v666
    %v699 = vunpack.c.l.b16 %v667
    %v700 = vunpack.c.l.b16 %v668
    %v701 = vunpack.c.l.b16 %v669
    %v702 = vunpack.c.l.b16 %v670
    %v703 = vunpack.c.l.b16 %v671
    %v704 = vunpack.c.l.b16 %v672
    %v705 = vunpack.c.l.b16 %v673
    %v706 = vpack.c.b16 %v691, %v690
    %v707 = vpack.c.b16 %v693, %v692
    %v708 = vpack.c.b16 %v695, %v694
    %v709 = vpack.c.b16 %v697, %v696
    %v710 = vpack.c.b16 %v699, %v698
    %v711 = vpack.c.b16 %v701, %v700
    %v712 = vpack.c.b16 %v703, %v702
    %v713 = vpack.c.b16 %v705, %v704
    %722 = vmatprep.subr.bf16.mxu0 0
    %723 = vmatpush1.bf16.msra.mxu0 %v706
    %724 = vmatprep.subr.bf16.mxu0 0
    %725 = vmatpush1.bf16.msra.mxu0 %v707
    %726 = vmatprep.subr.bf16.mxu0 0
    %727 = vmatpush1.bf16.msra.mxu0 %v708
    %728 = vmatprep.subr.bf16.mxu0 0
    %729 = vmatpush1.bf16.msra.mxu0 %v709
    %730 = vmatprep.subr.bf16.mxu0 0
    %731 = vmatpush1.bf16.msra.mxu0 %v710
    %732 = vmatprep.subr.bf16.mxu0 0
    %733 = vmatpush1.bf16.msra.mxu0 %v711
    %734 = vmatprep.subr.bf16.mxu0 0
    %735 = vmatpush1.bf16.msra.mxu0 %v712
    %736 = vmatprep.subr.bf16.mxu0 0
    %737 = vmatpush1.bf16.msra.mxu0 %v713
    %738 = vmatprep.subr.bf16.mxu0 0
    %739 = vmatpush1.bf16.msra.mxu0 0
    %740 = vmatprep.subr.bf16.mxu0 0
    %741 = vmatpush1.bf16.msra.mxu0 0
    %742 = vmatprep.subr.bf16.mxu0 0
    %743 = vmatpush1.bf16.msra.mxu0 0
    %744 = vmatprep.subr.bf16.mxu0 0
    %745 = vmatpush1.bf16.msra.mxu0 0
    %746 = vmatprep.subr.bf16.mxu0 0
    %747 = vmatpush1.bf16.msra.mxu0 0
    %748 = vmatprep.subr.bf16.mxu0 0
    %749 = vmatpush1.bf16.msra.mxu0 0
    %750 = vmatprep.subr.bf16.mxu0 0
    %751 = vmatpush1.bf16.msra.mxu0 0
    %752 = vmatprep.subr.bf16.mxu0 0
    %753 = vmatpush1.bf16.msra.mxu0 0
    %754 = vmatprep.mubr.bf16.mxu0 0
    %755 = vmatmul.mubr.bf16.gmra.mrb[0].mxu0 %v657
    %v756 = vpop.f32.mrb[0].mxu0
    %v757 = vadd.f32 0.0, %v756
    %v758 = vpop.f32.mrb[0].mxu0
    %v759 = vpop.f32.mrb[0].mxu0
    %v760 = vadd.f32 0.0, %v759
    %v761 = vpop.f32.mrb[0].mxu0
    %762 = vdwg.mxu0
    %v763 = vmax.f32 %v757, 0.0
    %v764 = vmax.f32 %v760, 0.0
    %v765 = vpack.c.bf16 %v764, %v763
    %v766 = vld [vmem:[#allocation8] sm:$0xf]
    %v767 = vld [vmem:[#allocation8 + $0x4] sm:$0xf]
    %v768 = vld [vmem:[#allocation8 + $0x8] sm:$0xf]
    %v769 = vld [vmem:[#allocation8 + $0xc] sm:$0xf]
    %v770 = vld [vmem:[#allocation8 + $0x10] sm:$0xf]
    %v771 = vld [vmem:[#allocation8 + $0x14] sm:$0xf]
    %v772 = vld [vmem:[#allocation8 + $0x18] sm:$0xf]
    %v773 = vld [vmem:[#allocation8 + $0x1c] sm:$0xf]
    %v774 = vld [vmem:[#allocation8 + $0x20] sm:$0xf]
    %v775 = vld [vmem:[#allocation8 + $0x24] sm:$0xf]
    %v776 = vld [vmem:[#allocation8 + $0x28] sm:$0xf]
    %v777 = vld [vmem:[#allocation8 + $0x2c] sm:$0xf]
    %v778 = vld [vmem:[#allocation8 + $0x30] sm:$0xf]
    %v779 = vld [vmem:[#allocation8 + $0x34] sm:$0xf]
    %v780 = vld [vmem:[#allocation8 + $0x38] sm:$0xf]
    %v781 = vld [vmem:[#allocation8 + $0x3c] sm:$0xf]
    %v798 = vunpack.c.l.b16 %v766
    %v799 = vunpack.c.l.b16 %v767
    %v800 = vunpack.c.l.b16 %v768
    %v801 = vunpack.c.l.b16 %v769
    %v802 = vunpack.c.l.b16 %v770
    %v803 = vunpack.c.l.b16 %v771
    %v804 = vunpack.c.l.b16 %v772
    %v805 = vunpack.c.l.b16 %v773
    %v806 = vunpack.c.l.b16 %v774
    %v807 = vunpack.c.l.b16 %v775
    %v808 = vunpack.c.l.b16 %v776
    %v809 = vunpack.c.l.b16 %v777
    %v810 = vunpack.c.l.b16 %v778
    %v811 = vunpack.c.l.b16 %v779
    %v812 = vunpack.c.l.b16 %v780
    %v813 = vunpack.c.l.b16 %v781
    %v814 = vpack.c.b16 %v799, %v798
    %v815 = vpack.c.b16 %v801, %v800
    %v816 = vpack.c.b16 %v803, %v802
    %v817 = vpack.c.b16 %v805, %v804
    %v818 = vpack.c.b16 %v807, %v806
    %v819 = vpack.c.b16 %v809, %v808
    %v820 = vpack.c.b16 %v811, %v810
    %v821 = vpack.c.b16 %v813, %v812
    %830 = vmatprep.subr.bf16.mxu0 0
    %831 = vmatpush1.bf16.msra.mxu0 %v814
    %832 = vmatprep.subr.bf16.mxu0 0
    %833 = vmatpush1.bf16.msra.mxu0 %v815
    %834 = vmatprep.subr.bf16.mxu0 0
    %835 = vmatpush1.bf16.msra.mxu0 %v816
    %836 = vmatprep.subr.bf16.mxu0 0
    %837 = vmatpush1.bf16.msra.mxu0 %v817
    %838 = vmatprep.subr.bf16.mxu0 0
    %839 = vmatpush1.bf16.msra.mxu0 %v818
    %840 = vmatprep.subr.bf16.mxu0 0
    %841 = vmatpush1.bf16.msra.mxu0 %v819
    %842 = vmatprep.subr.bf16.mxu0 0
    %843 = vmatpush1.bf16.msra.mxu0 %v820
    %844 = vmatprep.subr.bf16.mxu0 0
    %845 = vmatpush1.bf16.msra.mxu0 %v821
    %846 = vmatprep.subr.bf16.mxu0 0
    %847 = vmatpush1.bf16.msra.mxu0 0
    %848 = vmatprep.subr.bf16.mxu0 0
    %849 = vmatpush1.bf16.msra.mxu0 0
    %850 = vmatprep.subr.bf16.mxu0 0
    %851 = vmatpush1.bf16.msra.mxu0 0
    %852 = vmatprep.subr.bf16.mxu0 0
    %853 = vmatpush1.bf16.msra.mxu0 0
    %854 = vmatprep.subr.bf16.mxu0 0
    %855 = vmatpush1.bf16.msra.mxu0 0
    %856 = vmatprep.subr.bf16.mxu0 0
    %857 = vmatpush1.bf16.msra.mxu0 0
    %858 = vmatprep.subr.bf16.mxu0 0
    %859 = vmatpush1.bf16.msra.mxu0 0
    %860 = vmatprep.subr.bf16.mxu0 0
    %861 = vmatpush1.bf16.msra.mxu0 0
    %862 = vmatprep.mubr.bf16.mxu0 0
    %863 = vmatmul.mubr.bf16.gmra.mrb[0].mxu0 %v765
    %v864 = vpop.f32.mrb[0].mxu0
    %v865 = vadd.f32 0.0, %v864
    %v866 = vpop.f32.mrb[0].mxu0
    %v867 = vpop.f32.mrb[0].mxu0
    %v868 = vadd.f32 0.0, %v867
    %v869 = vpop.f32.mrb[0].mxu0
    %870 = vdwg.mxu0
    %871 = vst [vmem:[#allocation10] sm:$0xff] %v865
    %872 = vst [vmem:[#allocation10 + $0x8] sm:$0xff] %v868
    // Predicated region
    $region34: #{tpu_custom_call.1} parent=1 // pred_check
      _
    $region35: #{tpu_custom_call.1} parent=1 // pred_check_branch
      %874 = sbr.rel (0) target = $region37
    $region36: #{tpu_custom_call.1} parent=1 // pred_region
      %s876 = ssub.s32 256, 256
      %877 = vsyncadd [#allocation4], %s876
      %s878 = sshll.u32 [#allocation10], 4
      %s879 = int_to_ptr.vmem [resolvable:$true] %s878
      %884 = dma.vmem_to_hbm [thread:$0]  %s879, 256, %s4, [#allocation4], 128, 128, 8
    $region37: #{tpu_custom_call.1} parent=1 // pred_fallthru
      _
    // Predicated region
    $region38: #{tpu_custom_call.1} parent=1 // pred_check
      _
    $region39: #{tpu_custom_call.1} parent=1 // pred_check_branch
      %886 = sbr.rel (0) target = $region41
    $region40: #{tpu_custom_call.1} parent=1 // pred_region
      %887 = dma.done [#allocation4], 256
    $region41: #{tpu_custom_call.1} parent=1 // pred_fallthru
      _
    %888 = vsyncpa [#allocation3], 1
    %889 = vsyncpa [#allocation6], 1
    %890 = vsyncpa [#allocation9], 1
    %891 = vsyncpa [#allocation4], 1

// kernel: tpu_custom_call.1
$region0: #{tpu_custom_call.1}
  #allocation0 [shape = 'u32[]', space=smem, size = 0x4, offset = 0x4, fixed_abs, tag = 'smem constant byte address 0x4 - core index']
  #allocation1 [shape = 'u32[144,128]{1,0:T(1,128)}', space=vmem, size = 0x12000, scoped, tag = 'internal scratch']
  %s0 = inlined_call_operand.hbm [shape: f32[16,784], index: 0, kind: input, shape index: {}]
  %s1 = inlined_call_operand.hbm [shape: bf16[784,128], index: 1, kind: input, shape index: {}]
  %s2 = inlined_call_operand.hbm [shape: bf16[128,128], index: 2, kind: input, shape index: {}]
  %s3 = inlined_call_operand.hbm [shape: bf16[128,128], index: 3, kind: input, shape index: {}]
  %s4 = inlined_call_operand.hbm [shape: f32[16,128], index: 4, kind: output, shape index: {}]
  %s5 = sld [smem:[#allocation0]]
  $region42: #{tpu_custom_call.1} parent=0
    _
  %s7 = ssub.s32 1, %s5
  %s8 = scalar_select 0, %s7, %s5
  $region1: #{tpu_custom_call.1} parent=0
    #allocation2 [shape = 'u8[57344]{0}', space=vmem, size = 0xe000, scoped, tag = 'input window, operand 0, single buffered']
    #allocation3 [shape = 's32[1]{0}', space=sflag, size = 0x4, scoped, tag = 'scoped memory for tpu_custom_call.1']
    #allocation4 [shape = 's32[1]{0}', space=sflag, size = 0x4, scoped, tag = 'scoped memory for tpu_custom_call.1']
    #allocation5 [shape = 'u8[200704]{0}', space=vmem, size = 0x31000, scoped, tag = 'input window, operand 1, single buffered']
    #allocation6 [shape = 's32[1]{0}', space=sflag, size = 0x4, scoped, tag = 'scoped memory for tpu_custom_call.1']
    #allocation7 [shape = 'u8[32768]{0}', space=vmem, size = 0x8000, scoped, tag = 'input window, operand 2, single buffered']
    #allocation8 [shape = 'u8[32768]{0}', space=vmem, size = 0x8000, scoped, tag = 'input window, operand 3, single buffered']
    #allocation9 [shape = 's32[1]{0}', space=sflag, size = 0x4, scoped, tag = 'scoped memory for tpu_custom_call.1']
    #allocation10 [shape = 'u8[8192]{0}', space=vmem, size = 0x2000, scoped, tag = 'output window, operand 0, single buffered']
    %9 = vsyncpa [#allocation3], 0
    %10 = vsyncpa [#allocation6], 0
    %11 = vsyncpa [#allocation9], 0
    %12 = vsyncpa [#allocation4], 0
    // Predicated region
    $region2: #{tpu_custom_call.1} parent=1 // pred_check
      _
    $region3: #{tpu_custom_call.1} parent=1 // pred_check_branch
      %14 = sbr.rel (0) target = $region5
    $region4: #{tpu_custom_call.1} parent=1 // pred_region
      %s16 = ssub.s32 1792, 1792
      %17 = vsyncadd [#allocation3], %s16
      %s18 = sshll.u32 [#allocation2], 4
      %s19 = int_to_ptr.vmem [resolvable:$true] %s18
      %24 = dma.hbm_to_vmem [thread:$0]  %s0, 1792, %s19, [#allocation3], 896, 896, 56
    $region5: #{tpu_custom_call.1} parent=1 // pred_fallthru
      _
    // Predicated region
    $region6: #{tpu_custom_call.1} parent=1 // pred_check
      _
    $region7: #{tpu_custom_call.1} parent=1 // pred_check_branch
      %26 = sbr.rel (0) target = $region9
    $region8: #{tpu_custom_call.1} parent=1 // pred_region
      %s28 = ssub.s32 6272, 6272
      %29 = vsyncadd [#allocation6], %s28
      %s30 = sshll.u32 [#allocation5], 4
      %s31 = int_to_ptr.vmem [resolvable:$true] %s30
      %36 = dma.hbm_to_vmem [thread:$0]  %s1, 6272, %s31, [#allocation6], 64, 64, 4
    $region9: #{tpu_custom_call.1} parent=1 // pred_fallthru
      _
    // Predicated region
    $region10: #{tpu_custom_call.1} parent=1 // pred_check
      _
    $region11: #{tpu_custom_call.1} parent=1 // pred_check_branch
      %38 = sbr.rel (0) target = $region13
    $region12: #{tpu_custom_call.1} parent=1 // pred_region
      %s40 = ssub.s32 1024, 1024
      %41 = vsyncadd [#allocation6], %s40
      %s42 = sshll.u32 [#allocation7], 4
      %s43 = int_to_ptr.vmem [resolvable:$true] %s42
      %48 = dma.hbm_to_vmem [thread:$0]  %s2, 1024, %s43, [#allocation6], 64, 64, 4
    $region13: #{tpu_custom_call.1} parent=1 // pred_fallthru
      _
    // Predicated region
    $region14: #{tpu_custom_call.1} parent=1 // pred_check
      _
    $region15: #{tpu_custom_call.1} parent=1 // pred_check_branch
      %50 = sbr.rel (0) target = $region17
    $region16: #{tpu_custom_call.1} parent=1 // pred_region
      %s52 = ssub.s32 1024, 1024
      %53 = vsyncadd [#allocation9], %s52
      %s54 = sshll.u32 [#allocation8], 4
      %s55 = int_to_ptr.vmem [resolvable:$true] %s54
      %60 = dma.hbm_to_vmem [thread:$0]  %s3, 1024, %s55, [#allocation9], 64, 64, 4
    $region17: #{tpu_custom_call.1} parent=1 // pred_fallthru
      _
    // Predicated region
    $region18: #{tpu_custom_call.1} parent=1 // pred_check
      _
    $region19: #{tpu_custom_call.1} parent=1 // pred_check_branch
      %62 = sbr.rel (0) target = $region21
    $region20: #{tpu_custom_call.1} parent=1 // pred_region
      %63 = dma.done [#allocation3], 1792
    $region21: #{tpu_custom_call.1} parent=1 // pred_fallthru
      _
    // Predicated region
    $region22: #{tpu_custom_call.1} parent=1 // pred_check
      _
    $region23: #{tpu_custom_call.1} parent=1 // pred_check_branch
      %65 = sbr.rel (0) target = $region25
    $region24: #{tpu_custom_call.1} parent=1 // pred_region
      %66 = dma.done [#allocation6], 6272
    $region25: #{tpu_custom_call.1} parent=1 // pred_fallthru
      _
    // Predicated region
    $region26: #{tpu_custom_call.1} parent=1 // pred_check
      _
    $region27: #{tpu_custom_call.1} parent=1 // pred_check_branch
      %68 = sbr.rel (0) target = $region29
    $region28: #{tpu_custom_call.1} parent=1 // pred_region
      %69 = dma.done [#allocation6], 1024
    $region29: #{tpu_custom_call.1} parent=1 // pred_fallthru
      _
    // Predicated region
    $region30: #{tpu_custom_call.1} parent=1 // pred_check
      _
    $region31: #{tpu_custom_call.1} parent=1 // pred_check_branch
      %71 = sbr.rel (0) target = $region33
    $region32: #{tpu_custom_call.1} parent=1 // pred_region
      %72 = dma.done [#allocation9], 1024
    $region33: #{tpu_custom_call.1} parent=1 // pred_fallthru
      _
    %v74 = vld [vmem:[#allocation2] sm:$0xff]
    %v75 = vld [vmem:[#allocation2 + $0x8] sm:$0xff]
    %v76 = vld [vmem:[#allocation2 + $0x10] sm:$0xff]
    %v77 = vld [vmem:[#allocation2 + $0x18] sm:$0xff]
    %v78 = vld [vmem:[#allocation2 + $0x20] sm:$0xff]
    %v79 = vld [vmem:[#allocation2 + $0x28] sm:$0xff]
    %v80 = vld [vmem:[#allocation2 + $0x30] sm:$0xff]
    %v81 = vld [vmem:[#allocation2 + $0x38] sm:$0xff]
    %v82 = vld [vmem:[#allocation2 + $0x40] sm:$0xff]
    %v83 = vld [vmem:[#allocation2 + $0x48] sm:$0xff]
    %v84 = vld [vmem:[#allocation2 + $0x50] sm:$0xff]
    %v85 = vld [vmem:[#allocation2 + $0x58] sm:$0xff]
    %v86 = vld [vmem:[#allocation2 + $0x60] sm:$0xff]
    %v87 = vld [vmem:[#allocation2 + $0x68] sm:$0xff]
    %v88 = vpack.c.bf16 %v81, %v74
    %v89 = vpack.c.bf16 %v82, %v75
    %v90 = vpack.c.bf16 %v83, %v76
    %v91 = vpack.c.bf16 %v84, %v77
    %v92 = vpack.c.bf16 %v85, %v78
    %v93 = vpack.c.bf16 %v86, %v79
    %v94 = vpack.c.bf16 %v87, %v80
    %v95 = vld [vmem:[#allocation5] sm:$0xf]
    %v96 = vld [vmem:[#allocation5 + $0x4] sm:$0xf]
    %v97 = vld [vmem:[#allocation5 + $0x8] sm:$0xf]
    %v98 = vld [vmem:[#allocation5 + $0xc] sm:$0xf]
    %v99 = vld [vmem:[#allocation5 + $0x10] sm:$0xf]
    %v100 = vld [vmem:[#allocation5 + $0x14] sm:$0xf]
    %v101 = vld [vmem:[#allocation5 + $0x18] sm:$0xf]
    %v102 = vld [vmem:[#allocation5 + $0x1c] sm:$0xf]
    %v103 = vld [vmem:[#allocation5 + $0x20] sm:$0xf]
    %v104 = vld [vmem:[#allocation5 + $0x24] sm:$0xf]
    %v105 = vld [vmem:[#allocation5 + $0x28] sm:$0xf]
    %v106 = vld [vmem:[#allocation5 + $0x2c] sm:$0xf]
    %v107 = vld [vmem:[#allocation5 + $0x30] sm:$0xf]
    %v108 = vld [vmem:[#allocation5 + $0x34] sm:$0xf]
    %v109 = vld [vmem:[#allocation5 + $0x38] sm:$0xf]
    %v110 = vld [vmem:[#allocation5 + $0x3c] sm:$0xf]
    %v111 = vld [vmem:[#allocation5 + $0x40] sm:$0xf]
    %v112 = vld [vmem:[#allocation5 + $0x44] sm:$0xf]
    %v113 = vld [vmem:[#allocation5 + $0x48] sm:$0xf]
    %v114 = vld [vmem:[#allocation5 + $0x4c] sm:$0xf]
    %v115 = vld [vmem:[#allocation5 + $0x50] sm:$0xf]
    %v116 = vld [vmem:[#allocation5 + $0x54] sm:$0xf]
    %v117 = vld [vmem:[#allocation5 + $0x58] sm:$0xf]
    %v118 = vld [vmem:[#allocation5 + $0x5c] sm:$0xf]
    %v119 = vld [vmem:[#allocation5 + $0x60] sm:$0xf]
    %v120 = vld [vmem:[#allocation5 + $0x64] sm:$0xf]
    %v121 = vld [vmem:[#allocation5 + $0x68] sm:$0xf]
    %v122 = vld [vmem:[#allocation5 + $0x6c] sm:$0xf]
    %v123 = vld [vmem:[#allocation5 + $0x70] sm:$0xf]
    %v124 = vld [vmem:[#allocation5 + $0x74] sm:$0xf]
    %v125 = vld [vmem:[#allocation5 + $0x78] sm:$0xf]
    %v126 = vld [vmem:[#allocation5 + $0x7c] sm:$0xf]
    %v127 = vld [vmem:[#allocation5 + $0x80] sm:$0xf]
    %v128 = vld [vmem:[#allocation5 + $0x84] sm:$0xf]
    %v129 = vld [vmem:[#allocation5 + $0x88] sm:$0xf]
    %v130 = vld [vmem:[#allocation5 + $0x8c] sm:$0xf]
    %v131 = vld [vmem:[#allocation5 + $0x90] sm:$0xf]
    %v132 = vld [vmem:[#allocation5 + $0x94] sm:$0xf]
    %v133 = vld [vmem:[#allocation5 + $0x98] sm:$0xf]
    %v134 = vld [vmem:[#allocation5 + $0x9c] sm:$0xf]
    %v135 = vld [vmem:[#allocation5 + $0xa0] sm:$0xf]
    %v136 = vld [vmem:[#allocation5 + $0xa4] sm:$0xf]
    %v137 = vld [vmem:[#allocation5 + $0xa8] sm:$0xf]
    %v138 = vld [vmem:[#allocation5 + $0xac] sm:$0xf]
    %v139 = vld [vmem:[#allocation5 + $0xb0] sm:$0xf]
    %v140 = vld [vmem:[#allocation5 + $0xb4] sm:$0xf]
    %v141 = vld [vmem:[#allocation5 + $0xb8] sm:$0xf]
    %v142 = vld [vmem:[#allocation5 + $0xbc] sm:$0xf]
    %v143 = vld [vmem:[#allocation5 + $0xc0] sm:$0xf]
    %v144 = vld [vmem:[#allocation5 + $0xc4] sm:$0xf]
    %v145 = vld [vmem:[#allocation5 + $0xc8] sm:$0xf]
    %v146 = vld [vmem:[#allocation5 + $0xcc] sm:$0xf]
    %v147 = vld [vmem:[#allocation5 + $0xd0] sm:$0xf]
    %v148 = vld [vmem:[#allocation5 + $0xd4] sm:$0xf]
    %v149 = vld [vmem:[#allocation5 + $0xd8] sm:$0xf]
    %v150 = vld [vmem:[#allocation5 + $0xdc] sm:$0xf]
    %v151 = vld [vmem:[#allocation5 + $0xe0] sm:$0xf]
    %v152 = vld [vmem:[#allocation5 + $0xe4] sm:$0xf]
    %v153 = vld [vmem:[#allocation5 + $0xe8] sm:$0xf]
    %v154 = vld [vmem:[#allocation5 + $0xec] sm:$0xf]
    %v155 = vld [vmem:[#allocation5 + $0xf0] sm:$0xf]
    %v156 = vld [vmem:[#allocation5 + $0xf4] sm:$0xf]
    %v157 = vld [vmem:[#allocation5 + $0xf8] sm:$0xf]
    %v158 = vld [vmem:[#allocation5 + $0xfc] sm:$0xf]
    %v159 = vld [vmem:[#allocation5 + $0x100] sm:$0xf]
    %v160 = vld [vmem:[#allocation5 + $0x104] sm:$0xf]
    %v161 = vld [vmem:[#allocation5 + $0x108] sm:$0xf]
    %v162 = vld [vmem:[#allocation5 + $0x10c] sm:$0xf]
    %v163 = vld [vmem:[#allocation5 + $0x110] sm:$0xf]
    %v164 = vld [vmem:[#allocation5 + $0x114] sm:$0xf]
    %v165 = vld [vmem:[#allocation5 + $0x118] sm:$0xf]
    %v166 = vld [vmem:[#allocation5 + $0x11c] sm:$0xf]
    %v167 = vld [vmem:[#allocation5 + $0x120] sm:$0xf]
    %v168 = vld [vmem:[#allocation5 + $0x124] sm:$0xf]
    %v169 = vld [vmem:[#allocation5 + $0x128] sm:$0xf]
    %v170 = vld [vmem:[#allocation5 + $0x12c] sm:$0xf]
    %v171 = vld [vmem:[#allocation5 + $0x130] sm:$0xf]
    %v172 = vld [vmem:[#allocation5 + $0x134] sm:$0xf]
    %v173 = vld [vmem:[#allocation5 + $0x138] sm:$0xf]
    %v174 = vld [vmem:[#allocation5 + $0x13c] sm:$0xf]
    %v175 = vld [vmem:[#allocation5 + $0x140] sm:$0xf]
    %v176 = vld [vmem:[#allocation5 + $0x144] sm:$0xf]
    %v177 = vld [vmem:[#allocation5 + $0x148] sm:$0xf]
    %v178 = vld [vmem:[#allocation5 + $0x14c] sm:$0xf]
    %v179 = vld [vmem:[#allocation5 + $0x150] sm:$0xf]
    %v180 = vld [vmem:[#allocation5 + $0x154] sm:$0xf]
    %v181 = vld [vmem:[#allocation5 + $0x158] sm:$0xf]
    %v182 = vld [vmem:[#allocation5 + $0x15c] sm:$0xf]
    %v183 = vld [vmem:[#allocation5 + $0x160] sm:$0xf]
    %v184 = vld [vmem:[#allocation5 + $0x164] sm:$0xf]
    %v185 = vld [vmem:[#allocation5 + $0x168] sm:$0xf]
    %v186 = vld [vmem:[#allocation5 + $0x16c] sm:$0xf]
    %v187 = vld [vmem:[#allocation5 + $0x170] sm:$0xf]
    %v188 = vld [vmem:[#allocation5 + $0x174] sm:$0xf]
    %v189 = vld [vmem:[#allocation5 + $0x178] sm:$0xf]
    %v190 = vld [vmem:[#allocation5 + $0x17c] sm:$0xf]
    %v191 = vld [vmem:[#allocation5 + $0x180] sm:$0xf]
    %v192 = vld [vmem:[#allocation5 + $0x184] sm:$0xf]
    %v291 = vunpack.c.l.b16 %v95
    %v292 = vunpack.c.l.b16 %v96
    %v293 = vunpack.c.l.b16 %v97
    %v294 = vunpack.c.l.b16 %v98
    %v295 = vunpack.c.l.b16 %v99
    %v296 = vunpack.c.l.b16 %v100
    %v297 = vunpack.c.l.b16 %v101
    %v298 = vunpack.c.l.b16 %v102
    %v299 = vunpack.c.l.b16 %v103
    %v300 = vunpack.c.l.b16 %v104
    %v301 = vunpack.c.l.b16 %v105
    %v302 = vunpack.c.l.b16 %v106
    %v303 = vunpack.c.l.b16 %v107
    %v304 = vunpack.c.l.b16 %v108
    %v305 = vunpack.c.l.b16 %v109
    %v306 = vunpack.c.l.b16 %v110
    %v307 = vunpack.c.l.b16 %v111
    %v308 = vunpack.c.l.b16 %v112
    %v309 = vunpack.c.l.b16 %v113
    %v310 = vunpack.c.l.b16 %v114
    %v311 = vunpack.c.l.b16 %v115
    %v312 = vunpack.c.l.b16 %v116
    %v313 = vunpack.c.l.b16 %v117
    %v314 = vunpack.c.l.b16 %v118
    %v315 = vunpack.c.l.b16 %v119
    %v316 = vunpack.c.l.b16 %v120
    %v317 = vunpack.c.l.b16 %v121
    %v318 = vunpack.c.l.b16 %v122
    %v319 = vunpack.c.l.b16 %v123
    %v320 = vunpack.c.l.b16 %v124
    %v321 = vunpack.c.l.b16 %v125
    %v322 = vunpack.c.l.b16 %v126
    %v323 = vunpack.c.l.b16 %v127
    %v324 = vunpack.c.l.b16 %v128
    %v325 = vunpack.c.l.b16 %v129
    %v326 = vunpack.c.l.b16 %v130
    %v327 = vunpack.c.l.b16 %v131
    %v328 = vunpack.c.l.b16 %v132
    %v329 = vunpack.c.l.b16 %v133
    %v330 = vunpack.c.l.b16 %v134
    %v331 = vunpack.c.l.b16 %v135
    %v332 = vunpack.c.l.b16 %v136
    %v333 = vunpack.c.l.b16 %v137
    %v334 = vunpack.c.l.b16 %v138
    %v335 = vunpack.c.l.b16 %v139
    %v336 = vunpack.c.l.b16 %v140
    %v337 = vunpack.c.l.b16 %v141
    %v338 = vunpack.c.l.b16 %v142
    %v339 = vunpack.c.l.b16 %v143
    %v340 = vunpack.c.l.b16 %v144
    %v341 = vunpack.c.l.b16 %v145
    %v342 = vunpack.c.l.b16 %v146
    %v343 = vunpack.c.l.b16 %v147
    %v344 = vunpack.c.l.b16 %v148
    %v345 = vunpack.c.l.b16 %v149
    %v346 = vunpack.c.l.b16 %v150
    %v347 = vunpack.c.l.b16 %v151
    %v348 = vunpack.c.l.b16 %v152
    %v349 = vunpack.c.l.b16 %v153
    %v350 = vunpack.c.l.b16 %v154
    %v351 = vunpack.c.l.b16 %v155
    %v352 = vunpack.c.l.b16 %v156
    %v353 = vunpack.c.l.b16 %v157
    %v354 = vunpack.c.l.b16 %v158
    %v355 = vunpack.c.l.b16 %v159
    %v356 = vunpack.c.l.b16 %v160
    %v357 = vunpack.c.l.b16 %v161
    %v358 = vunpack.c.l.b16 %v162
    %v359 = vunpack.c.l.b16 %v163
    %v360 = vunpack.c.l.b16 %v164
    %v361 = vunpack.c.l.b16 %v165
    %v362 = vunpack.c.l.b16 %v166
    %v363 = vunpack.c.l.b16 %v167
    %v364 = vunpack.c.l.b16 %v168
    %v365 = vunpack.c.l.b16 %v169
    %v366 = vunpack.c.l.b16 %v170
    %v367 = vunpack.c.l.b16 %v171
    %v368 = vunpack.c.l.b16 %v172
    %v369 = vunpack.c.l.b16 %v173
    %v370 = vunpack.c.l.b16 %v174
    %v371 = vunpack.c.l.b16 %v175
    %v372 = vunpack.c.l.b16 %v176
    %v373 = vunpack.c.l.b16 %v177
    %v374 = vunpack.c.l.b16 %v178
    %v375 = vunpack.c.l.b16 %v179
    %v376 = vunpack.c.l.b16 %v180
    %v377 = vunpack.c.l.b16 %v181
    %v378 = vunpack.c.l.b16 %v182
    %v379 = vunpack.c.l.b16 %v183
    %v380 = vunpack.c.l.b16 %v184
    %v381 = vunpack.c.l.b16 %v185
    %v382 = vunpack.c.l.b16 %v186
    %v383 = vunpack.c.l.b16 %v187
    %v384 = vunpack.c.l.b16 %v188
    %v385 = vunpack.c.l.b16 %v189
    %v386 = vunpack.c.l.b16 %v190
    %v387 = vunpack.c.l.b16 %v191
    %v388 = vunpack.c.l.b16 %v192
    %v389 = vpack.c.b16 %v292, %v291
    %v390 = vpack.c.b16 %v294, %v293
    %v391 = vpack.c.b16 %v296, %v295
    %v392 = vpack.c.b16 %v298, %v297
    %v393 = vpack.c.b16 %v300, %v299
    %v394 = vpack.c.b16 %v302, %v301
    %v395 = vpack.c.b16 %v304, %v303
    %v396 = vpack.c.b16 %v306, %v305
    %v397 = vpack.c.b16 %v308, %v307
    %v398 = vpack.c.b16 %v310, %v309
    %v399 = vpack.c.b16 %v312, %v311
    %v400 = vpack.c.b16 %v314, %v313
    %v401 = vpack.c.b16 %v316, %v315
    %v402 = vpack.c.b16 %v318, %v317
    %v403 = vpack.c.b16 %v320, %v319
    %v404 = vpack.c.b16 %v322, %v321
    %v405 = vpack.c.b16 %v324, %v323
    %v406 = vpack.c.b16 %v326, %v325
    %v407 = vpack.c.b16 %v328, %v327
    %v408 = vpack.c.b16 %v330, %v329
    %v409 = vpack.c.b16 %v332, %v331
    %v410 = vpack.c.b16 %v334, %v333
    %v411 = vpack.c.b16 %v336, %v335
    %v412 = vpack.c.b16 %v338, %v337
    %v413 = vpack.c.b16 %v340, %v339
    %v414 = vpack.c.b16 %v342, %v341
    %v415 = vpack.c.b16 %v344, %v343
    %v416 = vpack.c.b16 %v346, %v345
    %v417 = vpack.c.b16 %v348, %v347
    %v418 = vpack.c.b16 %v350, %v349
    %v419 = vpack.c.b16 %v352, %v351
    %v420 = vpack.c.b16 %v354, %v353
    %v421 = vpack.c.b16 %v356, %v355
    %v422 = vpack.c.b16 %v358, %v357
    %v423 = vpack.c.b16 %v360, %v359
    %v424 = vpack.c.b16 %v362, %v361
    %v425 = vpack.c.b16 %v364, %v363
    %v426 = vpack.c.b16 %v366, %v365
    %v427 = vpack.c.b16 %v368, %v367
    %v428 = vpack.c.b16 %v370, %v369
    %v429 = vpack.c.b16 %v372, %v371
    %v430 = vpack.c.b16 %v374, %v373
    %v431 = vpack.c.b16 %v376, %v375
    %v432 = vpack.c.b16 %v378, %v377
    %v433 = vpack.c.b16 %v380, %v379
    %v434 = vpack.c.b16 %v382, %v381
    %v435 = vpack.c.b16 %v384, %v383
    %v436 = vpack.c.b16 %v386, %v385
    %v437 = vpack.c.b16 %v388, %v387
    %vm487 = vcmask 130048
    %v489 = vsel %vm487, %v94, 0
    %491 = vmatprep.subr.bf16.mxu0 0
    %492 = vmatpush1.bf16.msra.mxu0 %v389
    %493 = vmatprep.subr.bf16.mxu0 0
    %494 = vmatpush1.bf16.msra.mxu0 %v390
    %495 = vmatprep.subr.bf16.mxu0 0
    %496 = vmatpush1.bf16.msra.mxu0 %v391
    %497 = vmatprep.subr.bf16.mxu0 0
    %498 = vmatpush1.bf16.msra.mxu0 %v392
    %499 = vmatprep.subr.bf16.mxu0 0
    %500 = vmatpush1.bf16.msra.mxu0 %v393
    %501 = vmatprep.subr.bf16.mxu0 0
    %502 = vmatpush1.bf16.msra.mxu0 %v394
    %503 = vmatprep.subr.bf16.mxu0 0
    %504 = vmatpush1.bf16.msra.mxu0 %v395
    %505 = vmatprep.subr.bf16.mxu0 0
    %506 = vmatpush1.bf16.msra.mxu0 %v396
    %507 = vmatprep.subr.bf16.mxu0 0
    %508 = vmatpush1.bf16.msra.mxu0 %v397
    %509 = vmatprep.subr.bf16.mxu0 0
    %510 = vmatpush1.bf16.msra.mxu0 %v398
    %511 = vmatprep.subr.bf16.mxu0 0
    %512 = vmatpush1.bf16.msra.mxu0 %v399
    %513 = vmatprep.subr.bf16.mxu0 0
    %514 = vmatpush1.bf16.msra.mxu0 %v400
    %515 = vmatprep.subr.bf16.mxu0 0
    %516 = vmatpush1.bf16.msra.mxu0 %v401
    %517 = vmatprep.subr.bf16.mxu0 0
    %518 = vmatpush1.bf16.msra.mxu0 %v402
    %519 = vmatprep.subr.bf16.mxu0 0
    %520 = vmatpush1.bf16.msra.mxu0 %v403
    %521 = vmatprep.subr.bf16.mxu0 0
    %522 = vmatpush1.bf16.msra.mxu0 %v404
    %523 = vmatprep.mubr.bf16.mxu0 %v89
    %524 = vmatmul.mubr.bf16.gmra.mrb[0].mxu0 %v88
    %v525 = vpop.f32.mrb[0].mxu0
    %v526 = vadd.f32 0.0, %v525
    %v527 = vpop.f32.mrb[0].mxu0
    %v528 = vpop.f32.mrb[0].mxu0
    %v529 = vadd.f32 0.0, %v528
    %v530 = vpop.f32.mrb[0].mxu0
    %531 = vdwg.mxu0
    %532 = vmatprep.subr.bf16.mxu0 0
    %533 = vmatpush1.bf16.msra.mxu0 %v405
    %534 = vmatprep.subr.bf16.mxu0 0
    %535 = vmatpush1.bf16.msra.mxu0 %v406
    %536 = vmatprep.subr.bf16.mxu0 0
    %537 = vmatpush1.bf16.msra.mxu0 %v407
    %538 = vmatprep.subr.bf16.mxu0 0
    %539 = vmatpush1.bf16.msra.mxu0 %v408
    %540 = vmatprep.subr.bf16.mxu0 0
    %541 = vmatpush1.bf16.msra.mxu0 %v409
    %542 = vmatprep.subr.bf16.mxu0 0
    %543 = vmatpush1.bf16.msra.mxu0 %v410
    %544 = vmatprep.subr.bf16.mxu0 0
    %545 = vmatpush1.bf16.msra.mxu0 %v411
    %546 = vmatprep.subr.bf16.mxu0 0
    %547 = vmatpush1.bf16.msra.mxu0 %v412
    %548 = vmatprep.subr.bf16.mxu0 0
    %549 = vmatpush1.bf16.msra.mxu0 %v413
    %550 = vmatprep.subr.bf16.mxu0 0
    %551 = vmatpush1.bf16.msra.mxu0 %v414
    %552 = vmatprep.subr.bf16.mxu0 0
    %553 = vmatpush1.bf16.msra.mxu0 %v415
    %554 = vmatprep.subr.bf16.mxu0 0
    %555 = vmatpush1.bf16.msra.mxu0 %v416
    %556 = vmatprep.subr.bf16.mxu0 0
    %557 = vmatpush1.bf16.msra.mxu0 %v417
    %558 = vmatprep.subr.bf16.mxu0 0
    %559 = vmatpush1.bf16.msra.mxu0 %v418
    %560 = vmatprep.subr.bf16.mxu0 0
    %561 = vmatpush1.bf16.msra.mxu0 %v419
    %562 = vmatprep.subr.bf16.mxu0 0
    %563 = vmatpush1.bf16.msra.mxu0 %v420
    %564 = vmatprep.mubr.bf16.mxu0 %v91
    %565 = vmatmul.mubr.bf16.gmra.mrb[0].mxu0 %v90
    %v566 = vpop.f32.mrb[0].mxu0
    %v567 = vadd.f32 %v526, %v566
    %v568 = vpop.f32.mrb[0].mxu0
    %v569 = vpop.f32.mrb[0].mxu0
    %v570 = vadd.f32 %v529, %v569
    %v571 = vpop.f32.mrb[0].mxu0
    %572 = vdwg.mxu0
    %573 = vmatprep.subr.bf16.mxu0 0
    %574 = vmatpush1.bf16.msra.mxu0 %v421
    %575 = vmatprep.subr.bf16.mxu0 0
    %576 = vmatpush1.bf16.msra.mxu0 %v422
    %577 = vmatprep.subr.bf16.mxu0 0
    %578 = vmatpush1.bf16.msra.mxu0 %v423
    %579 = vmatprep.subr.bf16.mxu0 0
    %580 = vmatpush1.bf16.msra.mxu0 %v424
    %581 = vmatprep.subr.bf16.mxu0 0
    %582 = vmatpush1.bf16.msra.mxu0 %v425
    %583 = vmatprep.subr.bf16.mxu0 0
    %584 = vmatpush1.bf16.msra.mxu0 %v426
    %585 = vmatprep.subr.bf16.mxu0 0
    %586 = vmatpush1.bf16.msra.mxu0 %v427
    %587 = vmatprep.subr.bf16.mxu0 0
    %588 = vmatpush1.bf16.msra.mxu0 %v428
    %589 = vmatprep.subr.bf16.mxu0 0
    %590 = vmatpush1.bf16.msra.mxu0 %v429
    %591 = vmatprep.subr.bf16.mxu0 0
    %592 = vmatpush1.bf16.msra.mxu0 %v430
    %593 = vmatprep.subr.bf16.mxu0 0
    %594 = vmatpush1.bf16.msra.mxu0 %v431
    %595 = vmatprep.subr.bf16.mxu0 0
    %596 = vmatpush1.bf16.msra.mxu0 %v432
    %597 = vmatprep.subr.bf16.mxu0 0
    %598 = vmatpush1.bf16.msra.mxu0 %v433
    %599 = vmatprep.subr.bf16.mxu0 0
    %600 = vmatpush1.bf16.msra.mxu0 %v434
    %601 = vmatprep.subr.bf16.mxu0 0
    %602 = vmatpush1.bf16.msra.mxu0 %v435
    %603 = vmatprep.subr.bf16.mxu0 0
    %604 = vmatpush1.bf16.msra.mxu0 %v436
    %605 = vmatprep.mubr.bf16.mxu0 %v93
    %606 = vmatmul.mubr.bf16.gmra.mrb[0].mxu0 %v92
    %v607 = vpop.f32.mrb[0].mxu0
    %v608 = vadd.f32 %v567, %v607
    %v609 = vpop.f32.mrb[0].mxu0
    %v610 = vpop.f32.mrb[0].mxu0
    %v611 = vadd.f32 %v570, %v610
    %v612 = vpop.f32.mrb[0].mxu0
    %613 = vdwg.mxu0
    %614 = vmatprep.subr.bf16.mxu0 0
    %615 = vmatpush1.bf16.msra.mxu0 %v437
    %616 = vmatprep.subr.bf16.mxu0 0
    %617 = vmatpush1.bf16.msra.mxu0 0
    %618 = vmatprep.subr.bf16.mxu0 0
    %619 = vmatpush1.bf16.msra.mxu0 0
    %620 = vmatprep.subr.bf16.mxu0 0
    %621 = vmatpush1.bf16.msra.mxu0 0
    %622 = vmatprep.subr.bf16.mxu0 0
    %623 = vmatpush1.bf16.msra.mxu0 0
    %624 = vmatprep.subr.bf16.mxu0 0
    %625 = vmatpush1.bf16.msra.mxu0 0
    %626 = vmatprep.subr.bf16.mxu0 0
    %627 = vmatpush1.bf16.msra.mxu0 0
    %628 = vmatprep.subr.bf16.mxu0 0
    %629 = vmatpush1.bf16.msra.mxu0 0
    %630 = vmatprep.subr.bf16.mxu0 0
    %631 = vmatpush1.bf16.msra.mxu0 0
    %632 = vmatprep.subr.bf16.mxu0 0
    %633 = vmatpush1.bf16.msra.mxu0 0
    %634 = vmatprep.subr.bf16.mxu0 0
    %635 = vmatpush1.bf16.msra.mxu0 0
    %636 = vmatprep.subr.bf16.mxu0 0
    %637 = vmatpush1.bf16.msra.mxu0 0
    %638 = vmatprep.subr.bf16.mxu0 0
    %639 = vmatpush1.bf16.msra.mxu0 0
    %640 = vmatprep.subr.bf16.mxu0 0
    %641 = vmatpush1.bf16.msra.mxu0 0
    %642 = vmatprep.subr.bf16.mxu0 0
    %643 = vmatpush1.bf16.msra.mxu0 0
    %644 = vmatprep.subr.bf16.mxu0 0
    %645 = vmatpush1.bf16.msra.mxu0 0
    %646 = vmatprep.mubr.bf16.mxu0 0
    %647 = vmatmul.mubr.bf16.gmra.mrb[0].mxu0 %v489
    %v648 = vpop.f32.mrb[0].mxu0
    %v649 = vadd.f32 %v608, %v648
    %v650 = vpop.f32.mrb[0].mxu0
    %v651 = vpop.f32.mrb[0].mxu0
    %v652 = vadd.f32 %v611, %v651
    %v653 = vpop.f32.mrb[0].mxu0
    %654 = vdwg.mxu0
    %v655 = vmax.f32 %v649, 0.0
    %v656 = vmax.f32 %v652, 0.0
    %v657 = vpack.c.bf16 %v656, %v655
    %v658 = vld [vmem:[#allocation7] sm:$0xf]
    %v659 = vld [vmem:[#allocation7 + $0x4] sm:$0xf]
    %v660 = vld [vmem:[#allocation7 + $0x8] sm:$0xf]
    %v661 = vld [vmem:[#allocation7 + $0xc] sm:$0xf]
    %v662 = vld [vmem:[#allocation7 + $0x10] sm:$0xf]
    %v663 = vld [vmem:[#allocation7 + $0x14] sm:$0xf]
    %v664 = vld [vmem:[#allocation7 + $0x18] sm:$0xf]
    %v665 = vld [vmem:[#allocation7 + $0x1c] sm:$0xf]
    %v666 = vld [vmem:[#allocation7 + $0x20] sm:$0xf]
    %v667 = vld [vmem:[#allocation7 + $0x24] sm:$0xf]
    %v668 = vld [vmem:[#allocation7 + $0x28] sm:$0xf]
    %v669 = vld [vmem:[#allocation7 + $0x2c] sm:$0xf]
    %v670 = vld [vmem:[#allocation7 + $0x30] sm:$0xf]
    %v671 = vld [vmem:[#allocation7 + $0x34] sm:$0xf]
    %v672 = vld [vmem:[#allocation7 + $0x38] sm:$0xf]
    %v673 = vld [vmem:[#allocation7 + $0x3c] sm:$0xf]
    %v690 = vunpack.c.l.b16 %v658
    %v691 = vunpack.c.l.b16 %v659
    %v692 = vunpack.c.l.b16 %v660
    %v693 = vunpack.c.l.b16 %v661
    %v694 = vunpack.c.l.b16 %v662
    %v695 = vunpack.c.l.b16 %v663
    %v696 = vunpack.c.l.b16 %v664
    %v697 = vunpack.c.l.b16 %v665
    %v698 = vunpack.c.l.b16 %v666
    %v699 = vunpack.c.l.b16 %v667
    %v700 = vunpack.c.l.b16 %v668
    %v701 = vunpack.c.l.b16 %v669
    %v702 = vunpack.c.l.b16 %v670
    %v703 = vunpack.c.l.b16 %v671
    %v704 = vunpack.c.l.b16 %v672
    %v705 = vunpack.c.l.b16 %v673
    %v706 = vpack.c.b16 %v691, %v690
    %v707 = vpack.c.b16 %v693, %v692
    %v708 = vpack.c.b16 %v695, %v694
    %v709 = vpack.c.b16 %v697, %v696
    %v710 = vpack.c.b16 %v699, %v698
    %v711 = vpack.c.b16 %v701, %v700
    %v712 = vpack.c.b16 %v703, %v702
    %v713 = vpack.c.b16 %v705, %v704
    %722 = vmatprep.subr.bf16.mxu0 0
    %723 = vmatpush1.bf16.msra.mxu0 %v706
    %724 = vmatprep.subr.bf16.mxu0 0
    %725 = vmatpush1.bf16.msra.mxu0 %v707
    %726 = vmatprep.subr.bf16.mxu0 0
    %727 = vmatpush1.bf16.msra.mxu0 %v708
    %728 = vmatprep.subr.bf16.mxu0 0
    %729 = vmatpush1.bf16.msra.mxu0 %v709
    %730 = vmatprep.subr.bf16.mxu0 0
    %731 = vmatpush1.bf16.msra.mxu0 %v710
    %732 = vmatprep.subr.bf16.mxu0 0
    %733 = vmatpush1.bf16.msra.mxu0 %v711
    %734 = vmatprep.subr.bf16.mxu0 0
    %735 = vmatpush1.bf16.msra.mxu0 %v712
    %736 = vmatprep.subr.bf16.mxu0 0
    %737 = vmatpush1.bf16.msra.mxu0 %v713
    %738 = vmatprep.subr.bf16.mxu0 0
    %739 = vmatpush1.bf16.msra.mxu0 0
    %740 = vmatprep.subr.bf16.mxu0 0
    %741 = vmatpush1.bf16.msra.mxu0 0
    %742 = vmatprep.subr.bf16.mxu0 0
    %743 = vmatpush1.bf16.msra.mxu0 0
    %744 = vmatprep.subr.bf16.mxu0 0
    %745 = vmatpush1.bf16.msra.mxu0 0
    %746 = vmatprep.subr.bf16.mxu0 0
    %747 = vmatpush1.bf16.msra.mxu0 0
    %748 = vmatprep.subr.bf16.mxu0 0
    %749 = vmatpush1.bf16.msra.mxu0 0
    %750 = vmatprep.subr.bf16.mxu0 0
    %751 = vmatpush1.bf16.msra.mxu0 0
    %752 = vmatprep.subr.bf16.mxu0 0
    %753 = vmatpush1.bf16.msra.mxu0 0
    %754 = vmatprep.mubr.bf16.mxu0 0
    %755 = vmatmul.mubr.bf16.gmra.mrb[0].mxu0 %v657
    %v756 = vpop.f32.mrb[0].mxu0
    %v757 = vadd.f32 0.0, %v756
    %v758 = vpop.f32.mrb[0].mxu0
    %v759 = vpop.f32.mrb[0].mxu0
    %v760 = vadd.f32 0.0, %v759
    %v761 = vpop.f32.mrb[0].mxu0
    %762 = vdwg.mxu0
    %v763 = vmax.f32 %v757, 0.0
    %v764 = vmax.f32 %v760, 0.0
    %v765 = vpack.c.bf16 %v764, %v763
    %v766 = vld [vmem:[#allocation8] sm:$0xf]
    %v767 = vld [vmem:[#allocation8 + $0x4] sm:$0xf]
    %v768 = vld [vmem:[#allocation8 + $0x8] sm:$0xf]
    %v769 = vld [vmem:[#allocation8 + $0xc] sm:$0xf]
    %v770 = vld [vmem:[#allocation8 + $0x10] sm:$0xf]
    %v771 = vld [vmem:[#allocation8 + $0x14] sm:$0xf]
    %v772 = vld [vmem:[#allocation8 + $0x18] sm:$0xf]
    %v773 = vld [vmem:[#allocation8 + $0x1c] sm:$0xf]
    %v774 = vld [vmem:[#allocation8 + $0x20] sm:$0xf]
    %v775 = vld [vmem:[#allocation8 + $0x24] sm:$0xf]
    %v776 = vld [vmem:[#allocation8 + $0x28] sm:$0xf]
    %v777 = vld [vmem:[#allocation8 + $0x2c] sm:$0xf]
    %v778 = vld [vmem:[#allocation8 + $0x30] sm:$0xf]
    %v779 = vld [vmem:[#allocation8 + $0x34] sm:$0xf]
    %v780 = vld [vmem:[#allocation8 + $0x38] sm:$0xf]
    %v781 = vld [vmem:[#allocation8 + $0x3c] sm:$0xf]
    %v798 = vunpack.c.l.b16 %v766
    %v799 = vunpack.c.l.b16 %v767
    %v800 = vunpack.c.l.b16 %v768
    %v801 = vunpack.c.l.b16 %v769
    %v802 = vunpack.c.l.b16 %v770
    %v803 = vunpack.c.l.b16 %v771
    %v804 = vunpack.c.l.b16 %v772
    %v805 = vunpack.c.l.b16 %v773
    %v806 = vunpack.c.l.b16 %v774
    %v807 = vunpack.c.l.b16 %v775
    %v808 = vunpack.c.l.b16 %v776
    %v809 = vunpack.c.l.b16 %v777
    %v810 = vunpack.c.l.b16 %v778
    %v811 = vunpack.c.l.b16 %v779
    %v812 = vunpack.c.l.b16 %v780
    %v813 = vunpack.c.l.b16 %v781
    %v814 = vpack.c.b16 %v799, %v798
    %v815 = vpack.c.b16 %v801, %v800
    %v816 = vpack.c.b16 %v803, %v802
    %v817 = vpack.c.b16 %v805, %v804
    %v818 = vpack.c.b16 %v807, %v806
    %v819 = vpack.c.b16 %v809, %v808
    %v820 = vpack.c.b16 %v811, %v810
    %v821 = vpack.c.b16 %v813, %v812
    %830 = vmatprep.subr.bf16.mxu0 0
    %831 = vmatpush1.bf16.msra.mxu0 %v814
    %832 = vmatprep.subr.bf16.mxu0 0
    %833 = vmatpush1.bf16.msra.mxu0 %v815
    %834 = vmatprep.subr.bf16.mxu0 0
    %835 = vmatpush1.bf16.msra.mxu0 %v816
    %836 = vmatprep.subr.bf16.mxu0 0
    %837 = vmatpush1.bf16.msra.mxu0 %v817
    %838 = vmatprep.subr.bf16.mxu0 0
    %839 = vmatpush1.bf16.msra.mxu0 %v818
    %840 = vmatprep.subr.bf16.mxu0 0
    %841 = vmatpush1.bf16.msra.mxu0 %v819
    %842 = vmatprep.subr.bf16.mxu0 0
    %843 = vmatpush1.bf16.msra.mxu0 %v820
    %844 = vmatprep.subr.bf16.mxu0 0
    %845 = vmatpush1.bf16.msra.mxu0 %v821
    %846 = vmatprep.subr.bf16.mxu0 0
    %847 = vmatpush1.bf16.msra.mxu0 0
    %848 = vmatprep.subr.bf16.mxu0 0
    %849 = vmatpush1.bf16.msra.mxu0 0
    %850 = vmatprep.subr.bf16.mxu0 0
    %851 = vmatpush1.bf16.msra.mxu0 0
    %852 = vmatprep.subr.bf16.mxu0 0
    %853 = vmatpush1.bf16.msra.mxu0 0
    %854 = vmatprep.subr.bf16.mxu0 0
    %855 = vmatpush1.bf16.msra.mxu0 0
    %856 = vmatprep.subr.bf16.mxu0 0
    %857 = vmatpush1.bf16.msra.mxu0 0
    %858 = vmatprep.subr.bf16.mxu0 0
    %859 = vmatpush1.bf16.msra.mxu0 0
    %860 = vmatprep.subr.bf16.mxu0 0
    %861 = vmatpush1.bf16.msra.mxu0 0
    %862 = vmatprep.mubr.bf16.mxu0 0
    %863 = vmatmul.mubr.bf16.gmra.mrb[0].mxu0 %v765
    %v864 = vpop.f32.mrb[0].mxu0
    %v865 = vadd.f32 0.0, %v864
    %v866 = vpop.f32.mrb[0].mxu0
    %v867 = vpop.f32.mrb[0].mxu0
    %v868 = vadd.f32 0.0, %v867
    %v869 = vpop.f32.mrb[0].mxu0
    %870 = vdwg.mxu0
    %871 = vst [vmem:[#allocation10] sm:$0xff] %v865
    %872 = vst [vmem:[#allocation10 + $0x8] sm:$0xff] %v868
    // Predicated region
    $region34: #{tpu_custom_call.1} parent=1 // pred_check
      _
    $region35: #{tpu_custom_call.1} parent=1 // pred_check_branch
      %874 = sbr.rel (0) target = $region37
    $region36: #{tpu_custom_call.1} parent=1 // pred_region
      %s876 = ssub.s32 256, 256
      %877 = vsyncadd [#allocation4], %s876
      %s878 = sshll.u32 [#allocation10], 4
      %s879 = int_to_ptr.vmem [resolvable:$true] %s878
      %884 = dma.vmem_to_hbm [thread:$0]  %s879, 256, %s4, [#allocation4], 128, 128, 8
    $region37: #{tpu_custom_call.1} parent=1 // pred_fallthru
      _
    // Predicated region
    $region38: #{tpu_custom_call.1} parent=1 // pred_check
      _
    $region39: #{tpu_custom_call.1} parent=1 // pred_check_branch
      %886 = sbr.rel (0) target = $region41
    $region40: #{tpu_custom_call.1} parent=1 // pred_region
      %887 = dma.done [#allocation4], 256
    $region41: #{tpu_custom_call.1} parent=1 // pred_fallthru
      _
    %888 = vsyncpa [#allocation3], 1
    %889 = vsyncpa [#allocation6], 1
    %890 = vsyncpa [#allocation9], 1
    %891 = vsyncpa [#allocation4], 1

</llo_original>
